<compile_context>
chip_gen: v7x
topology: tpu7x:2x2x1
jax: 0.10.0
libtpu: 0.0.40
codegen_flags: <defaults>
</compile_context>

<pallas_src>
import functools
import numpy as np
import jax
import jax.numpy as jnp
from jax import lax
from jax.experimental import pallas as pl
from jax.experimental.pallas import tpu as pltpu

# ----------------------------- hyper-parameters ------------------------------
EMBED = 32
HIDDEN = 32
VOCAB_CODE = 40          # source (code) vocab size
VOCAB_SRC = 48           # target (natural language) vocab size
PAD, SOS, EOS, UNK = 0, 1, 2, 3


def _round_up(x, m):
    return ((x + m - 1) // m) * m


# ----------------------------- parameter init --------------------------------
def init_params(key):
    ks = jax.random.split(key, 20)

    def rn(k, shape, scale=0.08):
        return jax.random.normal(k, shape, dtype=jnp.float32) * scale

    p = {}
    p['src_embed'] = rn(ks[0], (VOCAB_CODE, EMBED))
    p['tgt_embed'] = rn(ks[1], (VOCAB_SRC, EMBED))
    # bidirectional encoder LSTM (PyTorch gate order i, f, g, o)
    for d, o in (('fwd', 2), ('bwd', 4)):
        p[f'enc_{d}_Wih'] = rn(ks[o], (4 * HIDDEN, EMBED))
        p[f'enc_{d}_Whh'] = rn(ks[o + 1], (4 * HIDDEN, HIDDEN))
        p[f'enc_{d}_bih'] = jnp.zeros((4 * HIDDEN,), jnp.float32)
        p[f'enc_{d}_bhh'] = jnp.zeros((4 * HIDDEN,), jnp.float32)
    # decoder LSTMCell with input feeding (input = embed + att_vec)
    p['dec_Wih'] = rn(ks[10], (4 * HIDDEN, EMBED + HIDDEN))
    p['dec_Whh'] = rn(ks[11], (4 * HIDDEN, HIDDEN))
    p['dec_bih'] = jnp.zeros((4 * HIDDEN,), jnp.float32)
    p['dec_bhh'] = jnp.zeros((4 * HIDDEN,), jnp.float32)
    p['att_src_W'] = rn(ks[12], (HIDDEN, 2 * HIDDEN))      # Linear(2H->H), no bias
    p['att_vec_W'] = rn(ks[13], (HIDDEN, 3 * HIDDEN))      # Linear(3H->H), no bias
    p['readout_W'] = rn(ks[14], (VOCAB_SRC, HIDDEN))       # Linear(H->V),  no bias
    p['cell_init_W'] = rn(ks[15], (HIDDEN, 2 * HIDDEN))
    p['cell_init_b'] = jnp.zeros((HIDDEN,), jnp.float32)
    p['pred_W'] = rn(ks[16], (2, HIDDEN))                  # tgt_token_predictor
    p['pred_b'] = jnp.zeros((2,), jnp.float32)
    p['ptr_W'] = rn(ks[17], (HIDDEN, 2 * HIDDEN))          # copy PointerNet linear
    return p


# ----------------------------- plain-JAX glue --------------------------------
def lstm_cell(x, h, c, Wih, Whh, bih, bhh):
    gates = x @ Wih.T + bih + h @ Whh.T + bhh
    i, f, g, o = jnp.split(gates, 4, axis=-1)
    i = jax.nn.sigmoid(i)
    f = jax.nn.sigmoid(f)
    g = jnp.tanh(g)
    o = jax.nn.sigmoid(o)
    c_new = f * c + i * g
    h_new = o * jnp.tanh(c_new)
    return h_new, c_new


def encode(params, src_tok, src_len):
    """Bidirectional LSTM encoder emulating pack_padded_sequence semantics."""
    B, S = src_tok.shape
    emb = params['src_embed'][src_tok]                                   # [B,S,E]
    pos = jnp.arange(S)[None, :]
    valid = (pos < src_len[:, None]).astype(jnp.float32)                 # [B,S]

    def run(x_seq, mask, pfx):
        def step(carry, inp):
            h, c = carry
            x_t, m_t = inp
            h_new, c_new = lstm_cell(x_t, h, c,
                                     params[pfx + '_Wih'], params[pfx + '_Whh'],
                                     params[pfx + '_bih'], params[pfx + '_bhh'])
            m = m_t[:, None]
            h = m * h_new + (1. - m) * h
            c = m * c_new + (1. - m) * c
            return (h, c), h_new * m
        h0 = jnp.zeros((B, HIDDEN), jnp.float32)
        c0 = jnp.zeros((B, HIDDEN), jnp.float32)
        (hT, cT), outs = lax.scan(step, (h0, c0),
                                  (jnp.swapaxes(x_seq, 0, 1), mask.T))
        return jnp.swapaxes(outs, 0, 1), hT, cT

    enc_f, hf, cf = run(emb, valid, 'enc_fwd')

    # per-example reversal within true length for the backward direction
    rev_idx = jnp.where(pos < src_len[:, None], src_len[:, None] - 1 - pos, pos)
    rev3 = jnp.broadcast_to(rev_idx[:, :, None], emb.shape)
    emb_rev = jnp.take_along_axis(emb, rev3, axis=1)
    enc_b_rev, hb, cb = run(emb_rev, valid, 'enc_bwd')
    rev3h = jnp.broadcast_to(rev_idx[:, :, None], enc_b_rev.shape)
    enc_b = jnp.take_along_axis(enc_b_rev, rev3h, axis=1)

    src_enc = jnp.concatenate([enc_f, enc_b], axis=-1)                   # [B,S,2H]
    last_cell = jnp.concatenate([cf, cb], axis=-1)                       # [B,2H]
    return src_enc, last_cell, valid


def decode(params, src_enc, src_valid, dec_init_cell, tgt_in_tok):
    """Attentional decoder with input feeding; returns att_vecs [T-1,B,H]."""
    B = src_enc.shape[0]
    h0 = jnp.tanh(dec_init_cell)
    c0 = dec_init_cell
    src_att = src_enc @ params['att_src_W'].T                            # [B,S,H]
    tgt_emb = params['tgt_embed'][tgt_in_tok]                            # [B,T-1,E]

    def step(carry, y_emb):
        h, c, att_tm1 = carry
        x = jnp.concatenate([y_emb, att_tm1], axis=-1)
        h, c = lstm_cell(x, h, c, params['dec_Wih'], params['dec_Whh'],
                         params['dec_bih'], params['dec_bhh'])
        att_w = jnp.einsum('bsh,bh->bs', src_att, h)
        att_w = jnp.where(src_valid > 0, att_w, jnp.float32(-1e30))
        alpha = jax.nn.softmax(att_w, axis=-1)
        ctx = jnp.einsum('bs,bsd->bd', alpha, src_enc)                   # [B,2H]
        att_t = jnp.tanh(jnp.concatenate([h, ctx], axis=-1) @ params['att_vec_W'].T)
        return (h, c, att_t), att_t

    att0 = jnp.zeros((B, HIDDEN), jnp.float32)
    _, att_vecs = lax.scan(step, (h0, c0, att0), jnp.swapaxes(tgt_emb, 0, 1))
    return att_vecs                                                      # [T-1,B,H]


# ----------------------------- Pallas kernel ---------------------------------
def _recon_score_kernel(gate_bias_ref, att_ref, wsh_ref, wcp_ref,
                        tgt_ref, genm_ref, cmask_ref, out_ref, *, v, s):
    """Scores one (example b, time-tile t) block of decoder positions.

    Column layouts:
      wsh  [H, VPs]: [0,v) readout over the NL vocab, v / v+1 gen/copy gate,
                     rest zero lane padding.
      wcp  [H, Sp] : this example's copy-pointer columns (src positions),
                     zero padded to a lane multiple.
    """
    att = att_ref[0]                                           # [TT, H] bf16
    # two bf16 MXU matmuls produce all logits for this tile
    ls = jnp.dot(att, wsh_ref[...],
                 preferred_element_type=jnp.float32)           # [TT, VPs]
    lc = jnp.dot(att, wcp_ref[0],
                 preferred_element_type=jnp.float32)           # [TT, Sp]
    vps = ls.shape[1]
    sp = lc.shape[1]

    # masks rebuilt in-kernel from iota (no mask DMA)
    neg = jnp.float32(-1e30)
    col_g = lax.broadcasted_iota(jnp.int32, ls.shape, 1)
    col_c = lax.broadcasted_iota(jnp.int32, lc.shape, 1)
    ls_m = jnp.where(col_g < v, ls, neg)                       # drop gate/pad cols
    lc_m = jnp.where(col_c < s, lc, neg)                       # drop lane padding

    # masked-before-exp softmax numerators (disallowed cols -> exactly 0)
    m_gen = jnp.max(ls_m, axis=-1, keepdims=True)              # XLU
    m_copy = jnp.max(lc_m, axis=-1, keepdims=True)             # XLU
    e_gen = jnp.exp(ls_m - m_gen)                              # EUP
    e_copy = jnp.exp(lc_m - m_copy)

    tgt = tgt_ref[0]                                           # [TT, 1] int32
    cmask = cmask_ref[0]                                       # [TT, Sp]
    gold_gen_e = e_gen * (col_g == tgt).astype(jnp.float32)    # row-dependent sel
    gold_copy_e = e_copy * cmask

    # cross-lane reductions as lane-broadcast ones-matmuls on the idle MXU
    # (every lane of the [TT,128] results holds the same reduced value).
    ones_g = jnp.ones((vps, 128), jnp.float32)
    ones_c = jnp.ones((sp, 128), jnp.float32)
    denom_gen = jnp.dot(e_gen, ones_g, preferred_element_type=jnp.float32)
    gold_gen = jnp.dot(gold_gen_e, ones_g, preferred_element_type=jnp.float32)
    denom_copy = jnp.dot(e_copy, ones_c, preferred_element_type=jnp.float32)
    gold_copy = jnp.dot(gold_copy_e, ones_c, preferred_element_type=jnp.float32)
    cm_sum = jnp.dot(cmask, ones_c, preferred_element_type=jnp.float32)

    # gen/copy gate: 2-way softmax == sigmoid of the logit difference.
    rg = lax.broadcasted_iota(jnp.int32, (vps, 128), 0)
    gate_rhs = ((rg == v).astype(jnp.float32)
                - (rg == v + 1).astype(jnp.float32))
    gate_d = (jnp.dot(ls, gate_rhs, preferred_element_type=jnp.float32)
              + gate_bias_ref[...])                            # [TT,128]
    p_gen = jax.nn.sigmoid(gate_d)                             # EUP

    gen_m = genm_ref[0]                                        # [TT, 1]
    tok_m = ((gen_m + cm_sum) > 0.0).astype(jnp.float32)       # [TT, 128]

    # exact divisions (denominators >= 1 by construction, never zero)
    prob = (p_gen * gen_m * gold_gen / denom_gen
            + (1.0 - p_gen) * gold_copy / denom_copy
            + 1e-7 * (1.0 - tok_m))
    lp = jnp.log(prob) * tok_m                                 # [TT, 128]

    partial = jnp.sum(lp, axis=0, keepdims=True)               # [1, 128]

    @pl.when(pl.program_id(1) == 0)
    def _():
        out_ref[...] = jnp.zeros_like(out_ref)
    out_ref[...] += partial


def copy_score_pallas(att_vecs, src_ptr, rd_w_t, pred_w, pred_b,
                      tgt_idx, gen_mask, copy_mask):
    """Per-example scores of the copy-augmented decoder (Pallas TPU path).

    Host side only transposes / pads / casts.  MXU operands go to HBM as bf16
    (half the DMA bytes, native MXU dtype); elementwise math stays f32 so the
    same kernel is safe on v5e (no bf16 VPU/EUP).
    """
    Tm1, B, H = att_vecs.shape
    S = src_ptr.shape[1]
    V = rd_w_t.shape[1]
    VPs = _round_up(V + 2, 128)          # readout | gate(2) | lane pad
    Sp = _round_up(S, 128)               # per-example copy columns
    TT = min(128, _round_up(Tm1, 16))    # time-tile rows (bf16 sublane friendly)
    Tm1p = _round_up(Tm1, TT)
    Tt = Tm1p // TT
    pad_t = Tm1p - Tm1

    att_be = jnp.transpose(att_vecs, (1, 0, 2))                       # [B,Tm1,H]
    att_be = jnp.pad(att_be, ((0, 0), (0, pad_t), (0, 0))).astype(jnp.bfloat16)

    w_sh = jnp.zeros((H, VPs), jnp.float32)
    w_sh = w_sh.at[:, :V].set(rd_w_t)                                  # readout
    w_sh = w_sh.at[:, V].set(pred_w[0])                                # gate: gen
    w_sh = w_sh.at[:, V + 1].set(pred_w[1])                            # gate: copy
    w_sh = w_sh.astype(jnp.bfloat16)

    w_cp = jnp.transpose(src_ptr, (0, 2, 1))                          # [B,H,S]
    w_cp = jnp.pad(w_cp, ((0, 0), (0, 0), (0, Sp - S))).astype(jnp.bfloat16)

    tgt_be = jnp.pad(jnp.transpose(tgt_idx[..., 0], (1, 0)),
                     ((0, 0), (0, pad_t)))[..., None].astype(jnp.int32)
    gen_be = jnp.pad(jnp.transpose(gen_mask[..., 0], (1, 0)),
                     ((0, 0), (0, pad_t)))[..., None].astype(jnp.float32)
    cm_be = jnp.pad(jnp.transpose(copy_mask, (1, 0, 2)),
                    ((0, 0), (0, pad_t), (0, Sp - S))).astype(jnp.float32)

    gate_bias = (pred_b[0, 0] - pred_b[0, 1]).reshape(1, 1).astype(jnp.float32)

    kernel = functools.partial(_recon_score_kernel, v=V, s=S)
    out = pl.pallas_call(
        kernel,
        out_shape=jax.ShapeDtypeStruct((1, B * 128), jnp.float32),
        grid=(B, Tt),
        in_specs=[
            pl.BlockSpec((1, 1), lambda b, t: (0, 0)),           # gate bias
            pl.BlockSpec((1, TT, H), lambda b, t: (b, t, 0)),    # att vectors (bf16)
            pl.BlockSpec((H, VPs), lambda b, t: (0, 0)),         # shared W (resident)
            pl.BlockSpec((1, H, Sp), lambda b, t: (b, 0, 0)),    # copy-pointer W of b
            pl.BlockSpec((1, TT, 1), lambda b, t: (b, t, 0)),    # gold token ids
            pl.BlockSpec((1, TT, 1), lambda b, t: (b, t, 0)),    # gen mask
            pl.BlockSpec((1, TT, Sp), lambda b, t: (b, t, 0)),   # compact copy mask
        ],
        out_specs=pl.BlockSpec((1, 128), lambda b, t: (0, b)),   # lane-dense per-b block
        compiler_params=pltpu.CompilerParams(
            dimension_semantics=("parallel", "arbitrary")),
    )(gate_bias, att_be, w_sh, w_cp, tgt_be, gen_be, cm_be)
    return out.reshape(B, 128)[:, 0]                                   # [B]


def copy_score_reference(att_vecs, src_ptr, rd_w_t, pred_w, pred_b,
                         tgt_idx, gen_mask, copy_mask):
    # Emulate the kernel's bf16 MXU operands so the check isolates kernel math
    # rather than dtype rounding.
    q = lambda x: x.astype(jnp.bfloat16).astype(jnp.float32)
    att_vecs, src_ptr, rd_w_t, pred_w = q(att_vecs), q(src_ptr), q(rd_w_t), q(pred_w)
    gen_logits = jnp.einsum('tbh,hv->tbv', att_vecs, rd_w_t)
    gen_prob = jax.nn.softmax(gen_logits, axis=-1)
    gold_gen = jnp.take_along_axis(gen_prob, tgt_idx, axis=-1)[..., 0]
    pred_logits = jnp.einsum('tbh,ph->tbp', att_vecs, pred_w) + pred_b[0]
    pred_prob = jax.nn.softmax(pred_logits, axis=-1)
    copy_logits = jnp.einsum('tbh,bsh->tbs', att_vecs, src_ptr)
    copy_prob = jax.nn.softmax(copy_logits, axis=-1)
    gold_copy = jnp.sum(copy_prob * copy_mask, axis=-1)
    gm = gen_mask[..., 0]
    token_mask = ((gm + copy_mask.sum(-1)) > 0).astype(jnp.float32)
    prob = (pred_prob[..., 0] * gold_gen * gm + pred_prob[..., 1] * gold_copy
            + 1e-7 * (1.0 - token_mask))
    return jnp.sum(jnp.log(prob) * token_mask, axis=0)


# -------------------------- Seq2SeqWithCopy scoring --------------------------
def seq2seq_copy_score(params, src_tok, src_len, tgt_tok,
                       copy_mask_full, gen_mask_full, use_pallas=True):
    src_enc, last_cell, src_valid = encode(params, src_tok, src_len)
    dec_init_cell = last_cell @ params['cell_init_W'].T + params['cell_init_b']
    att_vecs = decode(params, src_enc, src_valid, dec_init_cell, tgt_tok[:, :-1])

    src_ptr = src_enc @ params['ptr_W'].T                                # [B,S,H]
    rd_w_t = params['readout_W'].T                                       # [H,V]
    pred_b = params['pred_b'][None, :]                                   # [1,2]

    tgt_idx = jnp.transpose(tgt_tok[:, 1:], (1, 0))[:, :, None].astype(jnp.int32)
    gen_mask = gen_mask_full[1:][:, :, None]
    copy_mask = copy_mask_full[1:]

    fn = copy_score_pallas if use_pallas else copy_score_reference
    return fn(att_vecs, src_ptr, rd_w_t, params['pred_W'], pred_b,
              tgt_idx, gen_mask, copy_mask)


# ---------------------- Reconstructor.score host-side glue -------------------
def get_generate_and_copy_meta(src_codes, tgt_nls):
    tgt_full = [[SOS] + list(x) + [EOS] for x in tgt_nls]
    max_t = max(len(t) for t in tgt_full)
    max_s = max(len(s) for s in src_codes)
    B = len(src_codes)
    copy_mask = np.zeros((max_t, B, max_s), dtype=np.float32)
    gen_mask = np.zeros((max_t, B), dtype=np.float32)
    for t in range(max_t):
        for b, (src, tgt) in enumerate(zip(src_codes, tgt_full)):
            if t < len(tgt):
                tok = tgt[t]
                copy_pos = [i for i, s in enumerate(src) if s == tok]
                copy_mask[t, b, copy_pos] = 1.0
                g = 0
                if tok < VOCAB_CODE:          # "token is in vocab.code"
                    g = 1
                elif len(copy_pos) == 0:
                    g = 1
                gen_mask[t, b] = g
    return copy_mask, gen_mask


def reconstructor_score(params, examples, use_pallas=True):
    bsz = len(examples)
    code_lens = [len(e[0]) for e in examples]
    order = sorted(range(bsz), key=lambda i: -code_lens[i])
    old_pos = [0] * bsz
    for new, old in enumerate(order):
        old_pos[old] = new
    src_codes = [examples[i][0] for i in order]
    tgt_nls = [examples[i][1] for i in order]

    S = max(len(c) for c in src_codes)
    T = max(len(t) for t in tgt_nls) + 2
    src_tok = np.full((bsz, S), PAD, np.int32)
    src_len = np.array([len(c) for c in src_codes], np.int32)
    for b, c in enumerate(src_codes):
        src_tok[b, :len(c)] = [t if t < VOCAB_CODE else UNK for t in c]
    tgt_tok = np.full((bsz, T), PAD, np.int32)
    for b, t in enumerate(tgt_nls):
        row = [SOS] + [x if x < VOCAB_SRC else UNK for x in t] + [EOS]
        tgt_tok[b, :len(row)] = row

    copy_mask, gen_mask = get_generate_and_copy_meta(src_codes, tgt_nls)
    sorted_scores = seq2seq_copy_score(
        params, jnp.asarray(src_tok), jnp.asarray(src_len), jnp.asarray(tgt_tok),
        jnp.asarray(copy_mask), jnp.asarray(gen_mask), use_pallas=use_pallas)
    return sorted_scores[jnp.asarray(np.array(old_pos, np.int32))]


# --------------------------------- main ---------------------------------------
if __name__ == "__main__":
    key = jax.random.PRNGKey(0)
    kp, k1, k2 = jax.random.split(key, 3)
    params = init_params(kp)

    src_lens = [6, 8, 5, 7]
    tgt_lens = [5, 7, 4, 6]
    src_pool = np.array(jax.random.randint(k1, (4, 8), 4, VOCAB_CODE))
    tgt_pool = np.array(jax.random.randint(k2, (4, 8), 4, VOCAB_SRC))

    examples = []
    for b in range(4):
        src = [int(x) for x in src_pool[b, :src_lens[b]]]
        tgt = [int(x) for x in tgt_pool[b, :tgt_lens[b]]]
        tgt[0] = src[0]                       # ensure some copyable tokens
        if tgt_lens[b] > 2:
            tgt[2] = src[min(2, src_lens[b] - 1)]
        examples.append((src, tgt))

    scores = reconstructor_score(params, examples, use_pallas=True)
    scores = jax.block_until_ready(scores)
    scores_ref = reconstructor_score(params, examples, use_pallas=False)
    scores_ref = jax.block_until_ready(scores_ref)

    # kernel and reference both use bf16 matmul operands and exact softmax
    # divisions, so the comparison can be tight.
    np.testing.assert_allclose(np.asarray(scores), np.asarray(scores_ref),
                               rtol=2e-3, atol=2e-3)
    print("KERNEL_OK")
</pallas_src>

<mosaic_0001>
module attributes {stable_mosaic.version = 11 : i64} {
  func.func @_recon_score_kernel(%arg0: i32, %arg1: i32, %arg2: memref<1x1xf32, #tpu.memory_space<vmem>>, %arg3: memref<1x16x32xbf16, #tpu.memory_space<vmem>>, %arg4: memref<32x128xbf16, #tpu.memory_space<vmem>>, %arg5: memref<1x32x128xbf16, #tpu.memory_space<vmem>>, %arg6: memref<1x16x1xi32, #tpu.memory_space<vmem>>, %arg7: memref<1x16x1xf32, #tpu.memory_space<vmem>>, %arg8: memref<1x16x128xf32, #tpu.memory_space<vmem>>, %arg9: memref<1x128xf32, #tpu.memory_space<vmem>>) attributes {dimension_semantics = [#tpu.dimension_semantics<parallel>, #tpu.dimension_semantics<arbitrary>], iteration_bounds = array<i64: 4, 1>, scalar_prefetch = 0 : i64, scratch_operands = 0 : i64, tpu.core_type = #tpu.core_type<tc>, window_params = [{pipeline_mode = #tpu.pipeline_mode<synchronous>, transform_indices = @transform_0, window_bounds = array<i64: 1, 1>}, {transform_indices = @transform_1, window_bounds = array<i64: 1, 16, 32>}, {pipeline_mode = #tpu.pipeline_mode<synchronous>, transform_indices = @transform_2, window_bounds = array<i64: 32, 128>}, {transform_indices = @transform_3, window_bounds = array<i64: 1, 32, 128>}, {transform_indices = @transform_4, window_bounds = array<i64: 1, 16, 1>}, {transform_indices = @transform_5, window_bounds = array<i64: 1, 16, 1>}, {transform_indices = @transform_6, window_bounds = array<i64: 1, 16, 128>}, {transform_indices = @transform_7, window_bounds = array<i64: 1, 128>}]} {
    %c0 = arith.constant 0 : index
    %c0_0 = arith.constant 0 : index
    %c0_1 = arith.constant 0 : index
    %0 = vector.load %arg3[%c0, %c0_0, %c0_1] : memref<1x16x32xbf16, #tpu.memory_space<vmem>>, vector<1x16x32xbf16>
    %1 = vector.shape_cast %0 : vector<1x16x32xbf16> to vector<16x32xbf16>
    %c0_2 = arith.constant 0 : index
    %c0_3 = arith.constant 0 : index
    %2 = vector.load %arg4[%c0_2, %c0_3] : memref<32x128xbf16, #tpu.memory_space<vmem>>, vector<32x128xbf16>
    %cst = arith.constant dense<0.000000e+00> : vector<16x128xf32>
    %3 = tpu.matmul %1, %2, %cst {dimension_numbers = #tpu.dot_dimension_numbers<[1], [0], [0], [1], [0, 0, 1, 1], [], []>} : vector<16x32xbf16>, vector<32x128xbf16>, vector<16x128xf32> -> vector<16x128xf32>
    %c0_4 = arith.constant 0 : index
    %c0_5 = arith.constant 0 : index
    %c0_6 = arith.constant 0 : index
    %4 = vector.load %arg5[%c0_4, %c0_5, %c0_6] : memref<1x32x128xbf16, #tpu.memory_space<vmem>>, vector<1x32x128xbf16>
    %5 = vector.shape_cast %4 : vector<1x32x128xbf16> to vector<32x128xbf16>
    %cst_7 = arith.constant dense<0.000000e+00> : vector<16x128xf32>
    %6 = tpu.matmul %1, %5, %cst_7 {dimension_numbers = #tpu.dot_dimension_numbers<[1], [0], [0], [1], [0, 0, 1, 1], [], []>} : vector<16x32xbf16>, vector<32x128xbf16>, vector<16x128xf32> -> vector<16x128xf32>
    %7 = tpu.iota {dimensions = array<i32: 1>} : vector<16x128xi32>
    %8 = tpu.iota {dimensions = array<i32: 1>} : vector<16x128xi32>
    %c48_i32 = arith.constant 48 : i32
    %9 = vector.broadcast %c48_i32 : i32 to vector<16x128xi32>
    %10 = arith.cmpi slt, %7, %9 : vector<16x128xi32>
    %cst_8 = arith.constant -1.000000e+30 : f32
    %11 = vector.broadcast %cst_8 : f32 to vector<16x128xf32>
    %12 = arith.select %10, %3, %11 : vector<16x128xi1>, vector<16x128xf32>
    %c8_i32 = arith.constant 8 : i32
    %13 = vector.broadcast %c8_i32 : i32 to vector<16x128xi32>
    %14 = arith.cmpi slt, %8, %13 : vector<16x128xi32>
    %cst_9 = arith.constant -1.000000e+30 : f32
    %15 = vector.broadcast %cst_9 : f32 to vector<16x128xf32>
    %16 = arith.select %14, %6, %15 : vector<16x128xi1>, vector<16x128xf32>
    %cst_10 = arith.constant dense<0xFF800000> : vector<16xf32>
    %17 = vector.multi_reduction <maximumf>, %12, %cst_10 [1] : vector<16x128xf32> to vector<16xf32>
    %18 = vector.shape_cast %17 : vector<16xf32> to vector<16x1xf32>
    %cst_11 = arith.constant dense<0xFF800000> : vector<16xf32>
    %19 = vector.multi_reduction <maximumf>, %16, %cst_11 [1] : vector<16x128xf32> to vector<16xf32>
    %20 = vector.shape_cast %19 : vector<16xf32> to vector<16x1xf32>
    %21 = vector.broadcast %18 : vector<16x1xf32> to vector<16x128xf32>
    %22 = arith.subf %12, %21 : vector<16x128xf32>
    %23 = math.exp %22 : vector<16x128xf32>
    %24 = vector.broadcast %20 : vector<16x1xf32> to vector<16x128xf32>
    %25 = arith.subf %16, %24 : vector<16x128xf32>
    %26 = math.exp %25 : vector<16x128xf32>
    %c0_12 = arith.constant 0 : index
    %c0_13 = arith.constant 0 : index
    %c0_14 = arith.constant 0 : index
    %27 = vector.load %arg6[%c0_12, %c0_13, %c0_14] : memref<1x16x1xi32, #tpu.memory_space<vmem>>, vector<1x16x1xi32>
    %28 = vector.shape_cast %27 : vector<1x16x1xi32> to vector<16x1xi32>
    %c0_15 = arith.constant 0 : index
    %c0_16 = arith.constant 0 : index
    %c0_17 = arith.constant 0 : index
    %29 = vector.load %arg8[%c0_15, %c0_16, %c0_17] : memref<1x16x128xf32, #tpu.memory_space<vmem>>, vector<1x16x128xf32>
    %30 = vector.shape_cast %29 : vector<1x16x128xf32> to vector<16x128xf32>
    %31 = vector.broadcast %28 : vector<16x1xi32> to vector<16x128xi32>
    %32 = arith.cmpi eq, %7, %31 : vector<16x128xi32>
    %33 = arith.extui %32 : vector<16x128xi1> to vector<16x128xi32>
    %34 = arith.sitofp %33 : vector<16x128xi32> to vector<16x128xf32>
    %35 = arith.mulf %23, %34 : vector<16x128xf32>
    %36 = arith.mulf %26, %30 : vector<16x128xf32>
    %cst_18 = arith.constant 1.000000e+00 : f32
    %37 = vector.broadcast %cst_18 : f32 to vector<128x128xf32>
    %cst_19 = arith.constant 1.000000e+00 : f32
    %38 = vector.broadcast %cst_19 : f32 to vector<128x128xf32>
    %cst_20 = arith.constant dense<0.000000e+00> : vector<16x128xf32>
    %39 = tpu.matmul %23, %37, %cst_20 {dimension_numbers = #tpu.dot_dimension_numbers<[1], [0], [0], [1], [0, 0, 1, 1], [], []>} : vector<16x128xf32>, vector<128x128xf32>, vector<16x128xf32> -> vector<16x128xf32>
    %cst_21 = arith.constant dense<0.000000e+00> : vector<16x128xf32>
    %40 = tpu.matmul %35, %37, %cst_21 {dimension_numbers = #tpu.dot_dimension_numbers<[1], [0], [0], [1], [0, 0, 1, 1], [], []>} : vector<16x128xf32>, vector<128x128xf32>, vector<16x128xf32> -> vector<16x128xf32>
    %cst_22 = arith.constant dense<0.000000e+00> : vector<16x128xf32>
    %41 = tpu.matmul %26, %38, %cst_22 {dimension_numbers = #tpu.dot_dimension_numbers<[1], [0], [0], [1], [0, 0, 1, 1], [], []>} : vector<16x128xf32>, vector<128x128xf32>, vector<16x128xf32> -> vector<16x128xf32>
    %cst_23 = arith.constant dense<0.000000e+00> : vector<16x128xf32>
    %42 = tpu.matmul %36, %38, %cst_23 {dimension_numbers = #tpu.dot_dimension_numbers<[1], [0], [0], [1], [0, 0, 1, 1], [], []>} : vector<16x128xf32>, vector<128x128xf32>, vector<16x128xf32> -> vector<16x128xf32>
    %cst_24 = arith.constant dense<0.000000e+00> : vector<16x128xf32>
    %43 = tpu.matmul %30, %38, %cst_24 {dimension_numbers = #tpu.dot_dimension_numbers<[1], [0], [0], [1], [0, 0, 1, 1], [], []>} : vector<16x128xf32>, vector<128x128xf32>, vector<16x128xf32> -> vector<16x128xf32>
    %44 = tpu.iota {dimensions = array<i32: 0>} : vector<128x128xi32>
    %c48_i32_25 = arith.constant 48 : i32
    %45 = vector.broadcast %c48_i32_25 : i32 to vector<128x128xi32>
    %46 = arith.cmpi eq, %44, %45 : vector<128x128xi32>
    %47 = arith.extui %46 : vector<128x128xi1> to vector<128x128xi32>
    %48 = arith.sitofp %47 : vector<128x128xi32> to vector<128x128xf32>
    %c49_i32 = arith.constant 49 : i32
    %49 = vector.broadcast %c49_i32 : i32 to vector<128x128xi32>
    %50 = arith.cmpi eq, %44, %49 : vector<128x128xi32>
    %51 = arith.extui %50 : vector<128x128xi1> to vector<128x128xi32>
    %52 = arith.sitofp %51 : vector<128x128xi32> to vector<128x128xf32>
    %53 = arith.subf %48, %52 : vector<128x128xf32>
    %cst_26 = arith.constant dense<0.000000e+00> : vector<16x128xf32>
    %54 = tpu.matmul %3, %53, %cst_26 {dimension_numbers = #tpu.dot_dimension_numbers<[1], [0], [0], [1], [0, 0, 1, 1], [], []>} : vector<16x128xf32>, vector<128x128xf32>, vector<16x128xf32> -> vector<16x128xf32>
    %c0_27 = arith.constant 0 : index
    %c0_28 = arith.constant 0 : index
    %55 = vector.load %arg2[%c0_27, %c0_28] : memref<1x1xf32, #tpu.memory_space<vmem>>, vector<1x1xf32>
    %56 = vector.broadcast %55 : vector<1x1xf32> to vector<16x128xf32>
    %57 = arith.addf %54, %56 : vector<16x128xf32>
    %58 = arith.negf %57 : vector<16x128xf32>
    %59 = math.exp %58 : vector<16x128xf32>
    %cst_29 = arith.constant 1.000000e+00 : f32
    %60 = vector.broadcast %cst_29 : f32 to vector<16x128xf32>
    %61 = arith.addf %60, %59 : vector<16x128xf32>
    %62 = arith.divf %60, %61 : vector<16x128xf32>
    %c0_30 = arith.constant 0 : index
    %c0_31 = arith.constant 0 : index
    %c0_32 = arith.constant 0 : index
    %63 = vector.load %arg7[%c0_30, %c0_31, %c0_32] : memref<1x16x1xf32, #tpu.memory_space<vmem>>, vector<1x16x1xf32>
    %64 = vector.shape_cast %63 : vector<1x16x1xf32> to vector<16x1xf32>
    %65 = vector.broadcast %64 : vector<16x1xf32> to vector<16x128xf32>
    %66 = arith.addf %65, %43 : vector<16x128xf32>
    %cst_33 = arith.constant 0.000000e+00 : f32
    %67 = vector.broadcast %cst_33 : f32 to vector<16x128xf32>
    %68 = arith.cmpf ogt, %66, %67 : vector<16x128xf32>
    %69 = arith.extui %68 : vector<16x128xi1> to vector<16x128xi32>
    %70 = arith.sitofp %69 : vector<16x128xi32> to vector<16x128xf32>
    %71 = vector.broadcast %64 : vector<16x1xf32> to vector<16x128xf32>
    %72 = arith.mulf %62, %71 : vector<16x128xf32>
    %73 = arith.mulf %72, %40 : vector<16x128xf32>
    %74 = arith.divf %73, %39 : vector<16x128xf32>
    %cst_34 = arith.constant 1.000000e+00 : f32
    %75 = vector.broadcast %cst_34 : f32 to vector<16x128xf32>
    %76 = arith.subf %75, %62 : vector<16x128xf32>
    %77 = arith.mulf %76, %42 : vector<16x128xf32>
    %78 = arith.divf %77, %41 : vector<16x128xf32>
    %79 = arith.addf %74, %78 : vector<16x128xf32>
    %cst_35 = arith.constant 1.000000e+00 : f32
    %80 = vector.broadcast %cst_35 : f32 to vector<16x128xf32>
    %81 = arith.subf %80, %70 : vector<16x128xf32>
    %cst_36 = arith.constant 1.000000e-07 : f32
    %82 = vector.broadcast %cst_36 : f32 to vector<16x128xf32>
    %83 = arith.mulf %82, %81 : vector<16x128xf32>
    %84 = arith.addf %79, %83 : vector<16x128xf32>
    %85 = math.log %84 : vector<16x128xf32>
    %86 = arith.mulf %85, %70 : vector<16x128xf32>
    %cst_37 = arith.constant dense<0.000000e+00> : vector<128xf32>
    %87 = vector.multi_reduction <add>, %86, %cst_37 [0] : vector<16x128xf32> to vector<128xf32>
    %88 = vector.shape_cast %87 : vector<128xf32> to vector<1x128xf32>
    %c0_i32 = arith.constant 0 : i32
    %89 = arith.cmpi eq, %arg1, %c0_i32 : i32
    %90 = arith.extui %89 : i1 to i32
    %c0_i32_38 = arith.constant 0 : i32
    %91 = arith.cmpi ne, %90, %c0_i32_38 : i32
    scf.if %91 {
      %cst_43 = arith.constant 0.000000e+00 : f32
      %95 = vector.broadcast %cst_43 : f32 to vector<1x128xf32>
      %c0_44 = arith.constant 0 : index
      %c0_45 = arith.constant 0 : index
      %96 = vector.load %arg9[%c0_44, %c0_45] : memref<1x128xf32, #tpu.memory_space<vmem>>, vector<1x128xf32>
      tpu.vector_store %arg9[%c0_44, %c0_45], %95 {strides = array<i32>} : memref<1x128xf32, #tpu.memory_space<vmem>>, vector<1x128xf32>,
    } else {
    }
    %c0_39 = arith.constant 0 : index
    %c0_40 = arith.constant 0 : index
    %92 = vector.load %arg9[%c0_39, %c0_40] : memref<1x128xf32, #tpu.memory_space<vmem>>, vector<1x128xf32>
    %93 = arith.addf %92, %88 : vector<1x128xf32>
    %c0_41 = arith.constant 0 : index
    %c0_42 = arith.constant 0 : index
    %94 = vector.load %arg9[%c0_41, %c0_42] : memref<1x128xf32, #tpu.memory_space<vmem>>, vector<1x128xf32>
    tpu.vector_store %arg9[%c0_41, %c0_42], %93 {strides = array<i32>} : memref<1x128xf32, #tpu.memory_space<vmem>>, vector<1x128xf32>,
    return
  }
  func.func @transform_0(%arg0: i32, %arg1: i32) -> (i32, i32) {
    %c0_i32 = arith.constant 0 : i32
    %c0_i32_0 = arith.constant 0 : i32
    %c0_i32_1 = arith.constant 0 : i32
    return %c0_i32, %c0_i32_0 : i32, i32
  }
  func.func @transform_1(%arg0: i32, %arg1: i32) -> (i32, i32, i32) {
    %c0_i32 = arith.constant 0 : i32
    %c0_i32_0 = arith.constant 0 : i32
    return %arg0, %arg1, %c0_i32 : i32, i32, i32
  }
  func.func @transform_2(%arg0: i32, %arg1: i32) -> (i32, i32) {
    %c0_i32 = arith.constant 0 : i32
    %c0_i32_0 = arith.constant 0 : i32
    %c0_i32_1 = arith.constant 0 : i32
    return %c0_i32, %c0_i32_0 : i32, i32
  }
  func.func @transform_3(%arg0: i32, %arg1: i32) -> (i32, i32, i32) {
    %c0_i32 = arith.constant 0 : i32
    %c0_i32_0 = arith.constant 0 : i32
    %c0_i32_1 = arith.constant 0 : i32
    return %arg0, %c0_i32, %c0_i32_0 : i32, i32, i32
  }
  func.func @transform_4(%arg0: i32, %arg1: i32) -> (i32, i32, i32) {
    %c0_i32 = arith.constant 0 : i32
    %c0_i32_0 = arith.constant 0 : i32
    return %arg0, %arg1, %c0_i32 : i32, i32, i32
  }
  func.func @transform_5(%arg0: i32, %arg1: i32) -> (i32, i32, i32) {
    %c0_i32 = arith.constant 0 : i32
    %c0_i32_0 = arith.constant 0 : i32
    return %arg0, %arg1, %c0_i32 : i32, i32, i32
  }
  func.func @transform_6(%arg0: i32, %arg1: i32) -> (i32, i32, i32) {
    %c0_i32 = arith.constant 0 : i32
    %c0_i32_0 = arith.constant 0 : i32
    return %arg0, %arg1, %c0_i32 : i32, i32, i32
  }
  func.func @transform_7(%arg0: i32, %arg1: i32) -> (i32, i32) {
    %c0_i32 = arith.constant 0 : i32
    %c0_i32_0 = arith.constant 0 : i32
    return %c0_i32, %arg0 : i32, i32
  }
}

</mosaic_0001>

<llo_original>
// kernel: tpu_custom_call.1
$region0: #{tpu_custom_call.1}
  #allocation0 [shape = 'u32[]', space=smem, size = 0x4, offset = 0x4, fixed_abs, tag = 'smem constant byte address 0x4 - core index']
  #allocation1 [shape = 'u32[144,128]{1,0:T(1,128)}', space=vmem, size = 0x12000, scoped, tag = 'internal scratch']
  #allocation2 [shape = 'f32[1,1]{1,0:T(1,128)S(1)}', space=vmem, size = 0x200, scoped, tag = 'scoped memory for tpu_custom_call.1']
  %s0 = inlined_call_operand.<no memory space> [shape: f32[1,1], index: 0, kind: input, shape index: {}]
  %s1 = inlined_call_operand.hbm [shape: bf16[4,16,32], index: 1, kind: input, shape index: {}]
  %s2 = inlined_call_operand.hbm [shape: bf16[32,128], index: 2, kind: input, shape index: {}]
  %s3 = inlined_call_operand.vmem [shape: bf16[4,32,128], index: 3, kind: input, shape index: {}]
  %s4 = inlined_call_operand.vmem [shape: s32[4,16,1], index: 4, kind: input, shape index: {}]
  %s5 = inlined_call_operand.vmem [shape: f32[4,16,1], index: 5, kind: input, shape index: {}]
  %s6 = inlined_call_operand.vmem [shape: f32[4,16,128], index: 6, kind: input, shape index: {}]
  %s7 = inlined_call_operand.hbm [shape: f32[1,512], index: 7, kind: output, shape index: {}]
  %s8 = sld [smem:[#allocation0]]
  $region73: #{tpu_custom_call.1} parent=0
    _
  %s10 = ssub.s32 1, %s8
  %s11 = scalar_select 0, %s10, %s8
  %v12 = vstv %s0
  %13 = vst [vmem:[#allocation2] sm:$0x1] %v12
  $region1: #{tpu_custom_call.1} parent=0
    #allocation3 [shape = 'u8[8192]{0}', space=vmem, size = 0x2000, scoped, tag = 'input window, operand 1']
    #allocation4 [shape = 's32[2]{0}', space=sflag, size = 0x8, scoped, tag = 'scoped memory for tpu_custom_call.1']
    #allocation5 [shape = 's32[2]{0}', space=sflag, size = 0x8, scoped, tag = 'scoped memory for tpu_custom_call.1']
    #allocation6 [shape = 'u8[8192]{0}', space=vmem, size = 0x2000, scoped, tag = 'input window, operand 2, single buffered']
    #allocation7 [shape = 's32[1]{0}', space=sflag, size = 0x4, scoped, tag = 'scoped memory for tpu_custom_call.1']
    #allocation8 [shape = 'u8[1024]{0}', space=vmem, size = 0x400, scoped, tag = 'output window, operand 0']
    %14 = vsyncpa [#allocation4], 0
    %s15 = scalar_lea.sflag [#allocation4], 1
    %16 = vsyncpa %s15, 0
    %17 = vsyncpa [#allocation7], 0
    %18 = vsyncpa [#allocation5], 0
    %s19 = scalar_lea.sflag [#allocation5], 1
    %20 = vsyncpa %s19, 0
    loop: start=0, step=1, limit=6
    $region2: #{tpu_custom_call.1} parent=1 // loop_pre_header
      _
    $region3: #{tpu_custom_call.1} parent=1 // loop_header
      %s22 = sphi 0, %s26
      %p23 = scmp.ge.s32.totalorder %s22, 6
      %s29 = sphi 0, %s41
      %s30 = sphi 0, %s37
      %s31 = sphi 0, %s29
      %s32 = sphi 0, %s30
      %s33 = sphi 0, %s31
      %s34 = sphi 0, %s32
      %s42 = sphi 0, %s42
      %s44 = sphi 0, %s42
      %s45 = sphi 0, %s44
      %s59 = sphi 0, %s45
      %s67 = sphi 0, %s69
      %s70 = sphi 0, %s67
      %s71 = sphi 0, %s70
      %s87 = sphi 0, %s71
      %s91 = sphi 0, %s91
      %s93 = sphi 0, %s91
      %s94 = sphi 0, %s93
      %s108 = sphi 0, %s94
      %s114 = sphi 0, %s116
      %s117 = sphi 0, %s114
      %s118 = sphi 0, %s117
      %s134 = sphi 0, %s118
      %s142 = sphi 0, %s144
      %s145 = sphi 0, %s142
      %s146 = sphi 0, %s145
      %s162 = sphi 0, %s146
      %s170 = sphi 0, %s172
      %s173 = sphi 0, %s170
      %s174 = sphi 0, %s173
      %s190 = sphi 0, %s174
      %s198 = sphi 0, %s200
      %s201 = sphi 0, %s198
      %s202 = sphi 0, %s201
      %s218 = sphi 0, %s202
      %s224 = sphi 0, %s226
      %s227 = sphi 0, %s224
      %s228 = sphi 0, %s227
      %s244 = sphi 0, %s228
    $region4: #{tpu_custom_call.1} parent=1 // loop_header_branch
      %25 = sbr.rel (%p23) target = $region8
    $region5: #{tpu_custom_call.1} parent=1 // loop_body
      %s27 = ssub.s32 %s22, 1
      %s28 = ssub.s32 %s22, 2
      %s35 = sadd.s32 1, %s30
      %p36 = scmp.ge.s32.totalorder %s35, 1
      %s37 = scalar_select %p36, 0, %s35
      %s38 = sadd.s32 1, %s29
      %s39 = scalar_select %p36, %s38, %s29
      %p40 = scmp.ge.s32.totalorder %s39, 4
      %s41 = scalar_select %p40, 0, %s39
      %s43 = sadd.s32 %s42, 1
      %p46 = scmp.eq.s32.totalorder %s22, 3
      %p47 = scmp.ne.s32.totalorder %s42, %s44
      %p48 = scmp.eq.s32.totalorder %s22, 0
      %p49 = por %p47, %p48
      %p50 = scmp.ne.s32.totalorder %s42, %s44
      %p51 = scmp.eq.s32.totalorder %s27, 3
      %p52 = por %p50, %p51
      %p53 = scmp.ne.s32.totalorder %s44, %s45
      %p54 = scmp.eq.s32.totalorder %s27, 0
      %p55 = por %p53, %p54
      %p56 = scmp.ne.s32.totalorder %s44, %s45
      %p57 = scmp.eq.s32.totalorder %s28, 3
      %p58 = por %p56, %p57
      %p60 = scmp.ne.s32.totalorder %s45, %s59
      %p61 = scmp.eq.s32.totalorder %s28, 0
      %p62 = por %p60, %p61
      %s63 = ssub.s32 %s29, %s41
      %s64 = ssub.s32 %s30, %s37
      %s65 = sor.u32 %s63, %s64
      %p66 = scmp.eq.s32.totalorder %s65, 0
      %s68 = sadd.s32 %s67, 1
      %s69 = scalar_select %p66, %s67, %s68
      %p72 = pneg %p66
      %p73 = scmp.eq.s32.totalorder %s22, 3
      %p74 = por %p72, %p73
      %p75 = scmp.ne.s32.totalorder %s67, %s70
      %p76 = scmp.eq.s32.totalorder %s22, 0
      %p77 = por %p75, %p76
      %p78 = scmp.ne.s32.totalorder %s67, %s70
      %p79 = scmp.eq.s32.totalorder %s27, 3
      %p80 = por %p78, %p79
      %p81 = scmp.ne.s32.totalorder %s70, %s71
      %p82 = scmp.eq.s32.totalorder %s27, 0
      %p83 = por %p81, %p82
      %p84 = scmp.ne.s32.totalorder %s70, %s71
      %p85 = scmp.eq.s32.totalorder %s28, 3
      %p86 = por %p84, %p85
      %p88 = scmp.ne.s32.totalorder %s71, %s87
      %p89 = scmp.eq.s32.totalorder %s28, 0
      %p90 = por %p88, %p89
      %s92 = sadd.s32 %s91, 1
      %p95 = scmp.eq.s32.totalorder %s22, 3
      %p96 = scmp.ne.s32.totalorder %s91, %s93
      %p97 = scmp.eq.s32.totalorder %s22, 0
      %p98 = por %p96, %p97
      %p99 = scmp.ne.s32.totalorder %s91, %s93
      %p100 = scmp.eq.s32.totalorder %s27, 3
      %p101 = por %p99, %p100
      %p102 = scmp.ne.s32.totalorder %s93, %s94
      %p103 = scmp.eq.s32.totalorder %s27, 0
      %p104 = por %p102, %p103
      %p105 = scmp.ne.s32.totalorder %s93, %s94
      %p106 = scmp.eq.s32.totalorder %s28, 3
      %p107 = por %p105, %p106
      %p109 = scmp.ne.s32.totalorder %s94, %s108
      %p110 = scmp.eq.s32.totalorder %s28, 0
      %p111 = por %p109, %p110
      %s112 = ssub.s32 %s29, %s41
      %p113 = scmp.eq.s32.totalorder %s112, 0
      %s115 = sadd.s32 %s114, 1
      %s116 = scalar_select %p113, %s114, %s115
      %p119 = pneg %p113
      %p120 = scmp.eq.s32.totalorder %s22, 3
      %p121 = por %p119, %p120
      %p122 = scmp.ne.s32.totalorder %s114, %s117
      %p123 = scmp.eq.s32.totalorder %s22, 0
      %p124 = por %p122, %p123
      %p125 = scmp.ne.s32.totalorder %s114, %s117
      %p126 = scmp.eq.s32.totalorder %s27, 3
      %p127 = por %p125, %p126
      %p128 = scmp.ne.s32.totalorder %s117, %s118
      %p129 = scmp.eq.s32.totalorder %s27, 0
      %p130 = por %p128, %p129
      %p131 = scmp.ne.s32.totalorder %s117, %s118
      %p132 = scmp.eq.s32.totalorder %s28, 3
      %p133 = por %p131, %p132
      %p135 = scmp.ne.s32.totalorder %s118, %s134
      %p136 = scmp.eq.s32.totalorder %s28, 0
      %p137 = por %p135, %p136
      %s138 = ssub.s32 %s29, %s41
      %s139 = ssub.s32 %s30, %s37
      %s140 = sor.u32 %s138, %s139
      %p141 = scmp.eq.s32.totalorder %s140, 0
      %s143 = sadd.s32 %s142, 1
      %s144 = scalar_select %p141, %s142, %s143
      %p147 = pneg %p141
      %p148 = scmp.eq.s32.totalorder %s22, 3
      %p149 = por %p147, %p148
      %p150 = scmp.ne.s32.totalorder %s142, %s145
      %p151 = scmp.eq.s32.totalorder %s22, 0
      %p152 = por %p150, %p151
      %p153 = scmp.ne.s32.totalorder %s142, %s145
      %p154 = scmp.eq.s32.totalorder %s27, 3
      %p155 = por %p153, %p154
      %p156 = scmp.ne.s32.totalorder %s145, %s146
      %p157 = scmp.eq.s32.totalorder %s27, 0
      %p158 = por %p156, %p157
      %p159 = scmp.ne.s32.totalorder %s145, %s146
      %p160 = scmp.eq.s32.totalorder %s28, 3
      %p161 = por %p159, %p160
      %p163 = scmp.ne.s32.totalorder %s146, %s162
      %p164 = scmp.eq.s32.totalorder %s28, 0
      %p165 = por %p163, %p164
      %s166 = ssub.s32 %s29, %s41
      %s167 = ssub.s32 %s30, %s37
      %s168 = sor.u32 %s166, %s167
      %p169 = scmp.eq.s32.totalorder %s168, 0
      %s171 = sadd.s32 %s170, 1
      %s172 = scalar_select %p169, %s170, %s171
      %p175 = pneg %p169
      %p176 = scmp.eq.s32.totalorder %s22, 3
      %p177 = por %p175, %p176
      %p178 = scmp.ne.s32.totalorder %s170, %s173
      %p179 = scmp.eq.s32.totalorder %s22, 0
      %p180 = por %p178, %p179
      %p181 = scmp.ne.s32.totalorder %s170, %s173
      %p182 = scmp.eq.s32.totalorder %s27, 3
      %p183 = por %p181, %p182
      %p184 = scmp.ne.s32.totalorder %s173, %s174
      %p185 = scmp.eq.s32.totalorder %s27, 0
      %p186 = por %p184, %p185
      %p187 = scmp.ne.s32.totalorder %s173, %s174
      %p188 = scmp.eq.s32.totalorder %s28, 3
      %p189 = por %p187, %p188
      %p191 = scmp.ne.s32.totalorder %s174, %s190
      %p192 = scmp.eq.s32.totalorder %s28, 0
      %p193 = por %p191, %p192
      %s194 = ssub.s32 %s29, %s41
      %s195 = ssub.s32 %s30, %s37
      %s196 = sor.u32 %s194, %s195
      %p197 = scmp.eq.s32.totalorder %s196, 0
      %s199 = sadd.s32 %s198, 1
      %s200 = scalar_select %p197, %s198, %s199
      %p203 = pneg %p197
      %p204 = scmp.eq.s32.totalorder %s22, 3
      %p205 = por %p203, %p204
      %p206 = scmp.ne.s32.totalorder %s198, %s201
      %p207 = scmp.eq.s32.totalorder %s22, 0
      %p208 = por %p206, %p207
      %p209 = scmp.ne.s32.totalorder %s198, %s201
      %p210 = scmp.eq.s32.totalorder %s27, 3
      %p211 = por %p209, %p210
      %p212 = scmp.ne.s32.totalorder %s201, %s202
      %p213 = scmp.eq.s32.totalorder %s27, 0
      %p214 = por %p212, %p213
      %p215 = scmp.ne.s32.totalorder %s201, %s202
      %p216 = scmp.eq.s32.totalorder %s28, 3
      %p217 = por %p215, %p216
      %p219 = scmp.ne.s32.totalorder %s202, %s218
      %p220 = scmp.eq.s32.totalorder %s28, 0
      %p221 = por %p219, %p220
      %s222 = ssub.s32 %s29, %s41
      %p223 = scmp.eq.s32.totalorder %s222, 0
      %s225 = sadd.s32 %s224, 1
      %s226 = scalar_select %p223, %s224, %s225
      %p229 = pneg %p223
      %p230 = scmp.eq.s32.totalorder %s22, 3
      %p231 = por %p229, %p230
      %p232 = scmp.ne.s32.totalorder %s224, %s227
      %p233 = scmp.eq.s32.totalorder %s22, 0
      %p234 = por %p232, %p233
      %p235 = scmp.ne.s32.totalorder %s224, %s227
      %p236 = scmp.eq.s32.totalorder %s27, 3
      %p237 = por %p235, %p236
      %p238 = scmp.ne.s32.totalorder %s227, %s228
      %p239 = scmp.eq.s32.totalorder %s27, 0
      %p240 = por %p238, %p239
      %p241 = scmp.ne.s32.totalorder %s227, %s228
      %p242 = scmp.eq.s32.totalorder %s28, 3
      %p243 = por %p241, %p242
      %p245 = scmp.ne.s32.totalorder %s228, %s244
      %p246 = scmp.eq.s32.totalorder %s28, 0
      %p247 = por %p245, %p246
      %p248 = scmp.le.s32.totalorder 1, %s22
      %p249 = scmp.lt.s32.totalorder %s22, 5
      %p250 = pnand %p248, %p249
      %p251 = pneg %p250
      // Predicated region
      $region9: #{tpu_custom_call.1} parent=5 // pred_check
        _
      $region10: #{tpu_custom_call.1} parent=5 // pred_check_branch
        %253 = sbr.rel (%p250) target = $region12
      $region11: #{tpu_custom_call.1} parent=5 // pred_region
        %s254 = ssub.s32 %s22, 1
        // Predicated region
        $region13: #{tpu_custom_call.1} parent=11 // pred_check
          %p255 = pneg %p55
        $region14: #{tpu_custom_call.1} parent=11 // pred_check_branch
          %257 = sbr.rel (%p255) target = $region16
        $region15: #{tpu_custom_call.1} parent=11 // pred_region
          _
        $region16: #{tpu_custom_call.1} parent=11 // pred_fallthru
          _
        // Predicated region
        $region17: #{tpu_custom_call.1} parent=11 // pred_check
          %p258 = pneg %p104
        $region18: #{tpu_custom_call.1} parent=11 // pred_check_branch
          %260 = sbr.rel (%p258) target = $region20
        $region19: #{tpu_custom_call.1} parent=11 // pred_region
          %s262 = ssub.s32 256, 256
          %263 = vsyncadd [#allocation7], %s262
          %s264 = sshll.u32 [#allocation6], 4
          %s265 = int_to_ptr.vmem [resolvable:$true] %s264
          %270 = dma.hbm_to_vmem [thread:$0]  %s2, 256, %s265, [#allocation7], 64, 64, 4
        $region20: #{tpu_custom_call.1} parent=11 // pred_fallthru
          _
      $region12: #{tpu_custom_call.1} parent=5 // pred_fallthru
        _
      %p271 = scmp.lt.s32.totalorder %s22, 4
      // Predicated region
      $region21: #{tpu_custom_call.1} parent=5 // pred_check
        %p272 = pneg %p271
      $region22: #{tpu_custom_call.1} parent=5 // pred_check_branch
        %274 = sbr.rel (%p272) target = $region24
      $region23: #{tpu_custom_call.1} parent=5 // pred_region
        // Predicated region
        $region25: #{tpu_custom_call.1} parent=23 // pred_check
          %p275 = pneg %p77
        $region26: #{tpu_custom_call.1} parent=23 // pred_check_branch
          %277 = sbr.rel (%p275) target = $region28
        $region27: #{tpu_custom_call.1} parent=23 // pred_region
          %s278 = sand.u32 %s67, 1
          %s279 = scalar_lea.sflag [#allocation4], %s278
          %s280 = sand.u32 %s67, 1
          %s281 = smul.addr %s280, 8
          %s282 = scalar_lea.vmem [#allocation3], %s281
          %s283 = smul.u32 2, %s30
          %s285 = ssub.s32 128, 128
          %286 = vsyncadd %s279, %s285
          %s287 = smul.addr %s29, 2
          %s288 = sadd.s32 %s283, %s287
          %s289 = smul.addr %s288, 64
          %s290 = scalar_lea.hbm %s1, %s289
          %s291 = sshll.u32 %s282, 4
          %s292 = int_to_ptr.vmem [resolvable:$true] %s291
          %297 = dma.hbm_to_vmem [thread:$0]  %s290, 128, %s292, %s279, 64, 64, 4
        $region28: #{tpu_custom_call.1} parent=23 // pred_fallthru
          _
        // Predicated region
        $region29: #{tpu_custom_call.1} parent=23 // pred_check
          %p298 = pneg %p124
        $region30: #{tpu_custom_call.1} parent=23 // pred_check_branch
          %300 = sbr.rel (%p298) target = $region32
        $region31: #{tpu_custom_call.1} parent=23 // pred_region
          %p301 = scmp.lt.s32.totalorder %s29, 3
          %s302 = scalar_select %p301, %s29, 3
          %s303 = smul.addr %s302, 4
          %s304 = smul.addr %s303, 4
          %s305 = scalar_lea.vmem %s3, %s304
        $region32: #{tpu_custom_call.1} parent=23 // pred_fallthru
          _
        // Predicated region
        $region33: #{tpu_custom_call.1} parent=23 // pred_check
          %p306 = pneg %p152
        $region34: #{tpu_custom_call.1} parent=23 // pred_check_branch
          %308 = sbr.rel (%p306) target = $region36
        $region35: #{tpu_custom_call.1} parent=23 // pred_region
          %s309 = smul.u32 2, %s30
          %p310 = scmp.lt.s32.totalorder %s29, 3
          %s311 = scalar_select %p310, %s29, 3
          %p312 = scmp.lt.s32.totalorder %s309, 1
          %s313 = scalar_select %p312, %s309, 1
          %s314 = smul.addr %s311, 2
          %s315 = sadd.s32 %s313, %s314
          %s316 = smul.addr %s315, 8
          %s317 = scalar_lea.vmem %s4, %s316
          %s318 = smul.u32 2, %s30
        $region36: #{tpu_custom_call.1} parent=23 // pred_fallthru
          _
        // Predicated region
        $region37: #{tpu_custom_call.1} parent=23 // pred_check
          %p319 = pneg %p180
        $region38: #{tpu_custom_call.1} parent=23 // pred_check_branch
          %321 = sbr.rel (%p319) target = $region40
        $region39: #{tpu_custom_call.1} parent=23 // pred_region
          %s322 = smul.u32 2, %s30
          %p323 = scmp.lt.s32.totalorder %s29, 3
          %s324 = scalar_select %p323, %s29, 3
          %p325 = scmp.lt.s32.totalorder %s322, 1
          %s326 = scalar_select %p325, %s322, 1
          %s327 = smul.addr %s324, 2
          %s328 = sadd.s32 %s326, %s327
          %s329 = smul.addr %s328, 8
          %s330 = scalar_lea.vmem %s5, %s329
          %s331 = smul.u32 2, %s30
        $region40: #{tpu_custom_call.1} parent=23 // pred_fallthru
          _
        // Predicated region
        $region41: #{tpu_custom_call.1} parent=23 // pred_check
          %p332 = pneg %p208
        $region42: #{tpu_custom_call.1} parent=23 // pred_check_branch
          %334 = sbr.rel (%p332) target = $region44
        $region43: #{tpu_custom_call.1} parent=23 // pred_region
          %s335 = smul.u32 2, %s30
          %p336 = scmp.lt.s32.totalorder %s29, 3
          %s337 = scalar_select %p336, %s29, 3
          %p338 = scmp.lt.s32.totalorder %s335, 1
          %s339 = scalar_select %p338, %s335, 1
          %s340 = smul.addr %s337, 2
          %s341 = sadd.s32 %s339, %s340
          %s342 = smul.addr %s341, 8
          %s343 = scalar_lea.vmem %s6, %s342
          %s344 = smul.u32 2, %s30
        $region44: #{tpu_custom_call.1} parent=23 // pred_fallthru
          _
      $region24: #{tpu_custom_call.1} parent=5 // pred_fallthru
        _
      %p345 = scmp.le.s32.totalorder 1, %s22
      %p346 = scmp.lt.s32.totalorder %s22, 5
      %p347 = pnand %p345, %p346
      %p348 = pneg %p347
      // Predicated region
      $region45: #{tpu_custom_call.1} parent=5 // pred_check
        _
      $region46: #{tpu_custom_call.1} parent=5 // pred_check_branch
        %350 = sbr.rel (%p347) target = $region48
      $region47: #{tpu_custom_call.1} parent=5 // pred_region
        %s351 = ssub.s32 %s22, 1
        %s352 = sand.u32 %s70, 1
        %s353 = scalar_lea.sflag [#allocation4], %s352
        %s354 = sand.u32 %s70, 1
        %s355 = smul.addr %s354, 8
        %s356 = scalar_lea.vmem [#allocation3], %s355
        // Predicated region
        $region49: #{tpu_custom_call.1} parent=47 // pred_check
          %p357 = pneg %p83
        $region50: #{tpu_custom_call.1} parent=47 // pred_check_branch
          %359 = sbr.rel (%p357) target = $region52
        $region51: #{tpu_custom_call.1} parent=47 // pred_region
          %360 = dma.done %s353, 128
        $region52: #{tpu_custom_call.1} parent=47 // pred_fallthru
          _
        // Predicated region
        $region53: #{tpu_custom_call.1} parent=47 // pred_check
          %p361 = pneg %p104
        $region54: #{tpu_custom_call.1} parent=47 // pred_check_branch
          %363 = sbr.rel (%p361) target = $region56
        $region55: #{tpu_custom_call.1} parent=47 // pred_region
          %364 = dma.done [#allocation7], 256
        $region56: #{tpu_custom_call.1} parent=47 // pred_fallthru
          _
        %p365 = pneg %p55
        %p366 = pneg %p52
        %s367 = sand.u32 %s70, 1
        %s368 = scalar_lea.sflag [#allocation4], %s367
        %s369 = sand.u32 %s70, 1
        %s370 = smul.addr %s369, 8
        %s371 = scalar_lea.vmem [#allocation3], %s370
        %p372 = pneg %p83
        %p373 = pneg %p80
        %p374 = pneg %p104
        %p375 = pneg %p101
        %p376 = scmp.lt.s32.totalorder %s31, 3
        %s377 = scalar_select %p376, %s31, 3
        %s378 = smul.addr %s377, 4
        %s379 = smul.addr %s378, 4
        %s380 = scalar_lea.vmem %s3, %s379
        %p381 = pneg %p130
        %p382 = pneg %p127
        %s383 = smul.u32 2, %s32
        %p384 = scmp.lt.s32.totalorder %s31, 3
        %s385 = scalar_select %p384, %s31, 3
        %p386 = scmp.lt.s32.totalorder %s383, 1
        %s387 = scalar_select %p386, %s383, 1
        %s388 = smul.addr %s385, 2
        %s389 = sadd.s32 %s387, %s388
        %s390 = smul.addr %s389, 8
        %s391 = scalar_lea.vmem %s4, %s390
        %p392 = pneg %p158
        %p393 = pneg %p155
        %s394 = smul.u32 2, %s32
        %p395 = scmp.lt.s32.totalorder %s31, 3
        %s396 = scalar_select %p395, %s31, 3
        %p397 = scmp.lt.s32.totalorder %s394, 1
        %s398 = scalar_select %p397, %s394, 1
        %s399 = smul.addr %s396, 2
        %s400 = sadd.s32 %s398, %s399
        %s401 = smul.addr %s400, 8
        %s402 = scalar_lea.vmem %s5, %s401
        %p403 = pneg %p186
        %p404 = pneg %p183
        %s405 = smul.u32 2, %s32
        %p406 = scmp.lt.s32.totalorder %s31, 3
        %s407 = scalar_select %p406, %s31, 3
        %p408 = scmp.lt.s32.totalorder %s405, 1
        %s409 = scalar_select %p408, %s405, 1
        %s410 = smul.addr %s407, 2
        %s411 = sadd.s32 %s409, %s410
        %s412 = smul.addr %s411, 8
        %s413 = scalar_lea.vmem %s6, %s412
        %p414 = pneg %p214
        %p415 = pneg %p211
        %p416 = pneg %p240
        %p417 = pneg %p237
        %s418 = sand.u32 %s227, 1
        %s419 = scalar_lea.sflag [#allocation5], %s418
        %s420 = sand.u32 %s227, 1
        %s421 = scalar_lea.vmem [#allocation8], %s420
        %s422 = smul.u32 2, %s32
        %p423 = scmp.lt.s32.totalorder %s31, 3
        %s424 = scalar_select %p423, %s31, 3
        %s425 = smul.addr %s424, 4
        %s426 = smul.addr %s425, 4
        %s427 = scalar_lea.vmem %s3, %s426
        %s428 = smul.u32 2, %s32
        %p429 = scmp.lt.s32.totalorder %s31, 3
        %s430 = scalar_select %p429, %s31, 3
        %p431 = scmp.lt.s32.totalorder %s428, 1
        %s432 = scalar_select %p431, %s428, 1
        %s433 = smul.addr %s430, 2
        %s434 = sadd.s32 %s432, %s433
        %s435 = smul.addr %s434, 8
        %s436 = scalar_lea.vmem %s4, %s435
        %s437 = smul.u32 2, %s32
        %s438 = smul.u32 2, %s32
        %p439 = scmp.lt.s32.totalorder %s31, 3
        %s440 = scalar_select %p439, %s31, 3
        %p441 = scmp.lt.s32.totalorder %s438, 1
        %s442 = scalar_select %p441, %s438, 1
        %s443 = smul.addr %s440, 2
        %s444 = sadd.s32 %s442, %s443
        %s445 = smul.addr %s444, 8
        %s446 = scalar_lea.vmem %s5, %s445
        %s447 = smul.u32 2, %s32
        %s448 = smul.u32 2, %s32
        %p449 = scmp.lt.s32.totalorder %s31, 3
        %s450 = scalar_select %p449, %s31, 3
        %p451 = scmp.lt.s32.totalorder %s448, 1
        %s452 = scalar_select %p451, %s448, 1
        %s453 = smul.addr %s450, 2
        %s454 = sadd.s32 %s452, %s453
        %s455 = smul.addr %s454, 8
        %s456 = scalar_lea.vmem %s6, %s455
        %s457 = smul.u32 2, %s32
        %v459 = vld [vmem:[%s356] sm:$0xf]
        %v460 = vld [vmem:[%s356 + $0x4] sm:$0xf]
        %v461 = vld [vmem:[#allocation6] sm:$0xf]
        %v462 = vld [vmem:[#allocation6 + $0x4] sm:$0xf]
        %v463 = vld [vmem:[#allocation6 + $0x8] sm:$0xf]
        %v464 = vld [vmem:[#allocation6 + $0xc] sm:$0xf]
        %v467 = vunpack.c.l.b16 %v459
        %v468 = vunpack.c.l.b16 %v460
        %v469 = vpack.c.b16 %v468, %v467
        %v474 = vunpack.c.l.b16 %v461
        %v475 = vunpack.c.l.b16 %v462
        %v476 = vunpack.c.l.b16 %v463
        %v477 = vunpack.c.l.b16 %v464
        %v478 = vpack.c.b16 %v475, %v474
        %v479 = vpack.c.b16 %v477, %v476
        %vm482 = vcmask 261120
        %v484 = vsel %vm482, %v469, 0
        %486 = vmatprep.subr.bf16.mxu0 0
        %487 = vmatpush1.bf16.msra.mxu0 %v478
        %488 = vmatprep.subr.bf16.mxu0 0
        %489 = vmatpush1.bf16.msra.mxu0 %v479
        %490 = vmatprep.subr.bf16.mxu0 0
        %491 = vmatpush1.bf16.msra.mxu0 0
        %492 = vmatprep.subr.bf16.mxu0 0
        %493 = vmatpush1.bf16.msra.mxu0 0
        %494 = vmatprep.subr.bf16.mxu0 0
        %495 = vmatpush1.bf16.msra.mxu0 0
        %496 = vmatprep.subr.bf16.mxu0 0
        %497 = vmatpush1.bf16.msra.mxu0 0
        %498 = vmatprep.subr.bf16.mxu0 0
        %499 = vmatpush1.bf16.msra.mxu0 0
        %500 = vmatprep.subr.bf16.mxu0 0
        %501 = vmatpush1.bf16.msra.mxu0 0
        %502 = vmatprep.subr.bf16.mxu0 0
        %503 = vmatpush1.bf16.msra.mxu0 0
        %504 = vmatprep.subr.bf16.mxu0 0
        %505 = vmatpush1.bf16.msra.mxu0 0
        %506 = vmatprep.subr.bf16.mxu0 0
        %507 = vmatpush1.bf16.msra.mxu0 0
        %508 = vmatprep.subr.bf16.mxu0 0
        %509 = vmatpush1.bf16.msra.mxu0 0
        %510 = vmatprep.subr.bf16.mxu0 0
        %511 = vmatpush1.bf16.msra.mxu0 0
        %512 = vmatprep.subr.bf16.mxu0 0
        %513 = vmatpush1.bf16.msra.mxu0 0
        %514 = vmatprep.subr.bf16.mxu0 0
        %515 = vmatpush1.bf16.msra.mxu0 0
        %516 = vmatprep.subr.bf16.mxu0 0
        %517 = vmatpush1.bf16.msra.mxu0 0
        %518 = vmatprep.mubr.bf16.mxu0 0
        %519 = vmatmul.mubr.bf16.gmra.mrb[0].mxu0 %v484
        %v520 = vpop.f32.mrb[0].mxu0
        %v521 = vadd.f32 0.0, %v520
        %v522 = vpop.f32.mrb[0].mxu0
        %v523 = vpop.f32.mrb[0].mxu0
        %v524 = vadd.f32 0.0, %v523
        %v525 = vpop.f32.mrb[0].mxu0
        %526 = vdwg.mxu0
        %v527 = vld [vmem:[%s427] sm:$0xf]
        %v528 = vld [vmem:[%s427 + $0x4] sm:$0xf]
        %v529 = vld [vmem:[%s427 + $0x8] sm:$0xf]
        %v530 = vld [vmem:[%s427 + $0xc] sm:$0xf]
        %v535 = vunpack.c.l.b16 %v527
        %v536 = vunpack.c.l.b16 %v528
        %v537 = vunpack.c.l.b16 %v529
        %v538 = vunpack.c.l.b16 %v530
        %v539 = vpack.c.b16 %v536, %v535
        %v540 = vpack.c.b16 %v538, %v537
        %543 = vmatprep.subr.bf16.mxu0 0
        %544 = vmatpush1.bf16.msra.mxu0 %v539
        %545 = vmatprep.subr.bf16.mxu0 0
        %546 = vmatpush1.bf16.msra.mxu0 %v540
        %547 = vmatprep.subr.bf16.mxu0 0
        %548 = vmatpush1.bf16.msra.mxu0 0
        %549 = vmatprep.subr.bf16.mxu0 0
        %550 = vmatpush1.bf16.msra.mxu0 0
        %551 = vmatprep.subr.bf16.mxu0 0
        %552 = vmatpush1.bf16.msra.mxu0 0
        %553 = vmatprep.subr.bf16.mxu0 0
        %554 = vmatpush1.bf16.msra.mxu0 0
        %555 = vmatprep.subr.bf16.mxu0 0
        %556 = vmatpush1.bf16.msra.mxu0 0
        %557 = vmatprep.subr.bf16.mxu0 0
        %558 = vmatpush1.bf16.msra.mxu0 0
        %559 = vmatprep.subr.bf16.mxu0 0
        %560 = vmatpush1.bf16.msra.mxu0 0
        %561 = vmatprep.subr.bf16.mxu0 0
        %562 = vmatpush1.bf16.msra.mxu0 0
        %563 = vmatprep.subr.bf16.mxu0 0
        %564 = vmatpush1.bf16.msra.mxu0 0
        %565 = vmatprep.subr.bf16.mxu0 0
        %566 = vmatpush1.bf16.msra.mxu0 0
        %567 = vmatprep.subr.bf16.mxu0 0
        %568 = vmatpush1.bf16.msra.mxu0 0
        %569 = vmatprep.subr.bf16.mxu0 0
        %570 = vmatpush1.bf16.msra.mxu0 0
        %571 = vmatprep.subr.bf16.mxu0 0
        %572 = vmatpush1.bf16.msra.mxu0 0
        %573 = vmatprep.subr.bf16.mxu0 0
        %574 = vmatpush1.bf16.msra.mxu0 0
        %575 = vmatprep.mubr.bf16.mxu0 0
        %576 = vmatmul.mubr.bf16.gmra.mrb[0].mxu0 %v484
        %v577 = vpop.f32.mrb[0].mxu0
        %v578 = vadd.f32 0.0, %v577
        %v579 = vpop.f32.mrb[0].mxu0
        %v580 = vpop.f32.mrb[0].mxu0
        %v581 = vadd.f32 0.0, %v580
        %v582 = vpop.f32.mrb[0].mxu0
        %583 = vdwg.mxu0
        %v584 = vlaneseq
        %v585 = vand.u32 %v584, 127
        %vm586 = vcmp.lt.s32.totalorder %v585, 48
        %v587 = vsel %vm586, %v521, -1e+30
        %v588 = vsel %vm586, %v524, -1e+30
        %vm589 = vcmp.lt.s32.totalorder %v585, 8
        %v590 = vsel %vm589, %v578, -1e+30
        %v591 = vsel %vm589, %v581, -1e+30
        %592 = vmax.xlane.f32.xlu0 %v587
        %v593 = vpop.xlane.xlu0 %592
        %594 = vmax.xlane.f32.xlu0 %v588
        %v595 = vpop.xlane.xlu0 %594
        %596 = vmax.xlane.f32.xlu0 %v590
        %v597 = vpop.xlane.xlu0 %596
        %598 = vmax.xlane.f32.xlu0 %v591
        %v599 = vpop.xlane.xlu0 %598
        %v600 = vsub.f32 %v587, %v593
        %v601 = vsub.f32 %v588, %v595
        %v602 = vmul.f32 %v600, 1.442695
        %v603 = vpow.pop %v602
        %v604 = vmul.f32 %v601, 1.442695
        %v605 = vpow.pop %v604
        %v606 = vsub.f32 %v590, %v597
        %v607 = vsub.f32 %v591, %v599
        %v608 = vmul.f32 %v606, 1.442695
        %v609 = vpow.pop %v608
        %v610 = vmul.f32 %v607, 1.442695
        %v611 = vpow.pop %v610
        %v612 = vld [vmem:[%s436] sm:$0xff]
        %v613 = vld [vmem:[%s436 + $0x8] sm:$0xff]
        %v614 = vld [vmem:[%s456] sm:$0xff]
        %v615 = vld [vmem:[%s456 + $0x8] sm:$0xff]
        %616 = vset.pattern.permute.xlu0 0
        %617 = vperm.xlu0 %616, %v612
        %v618 = vpop.permute.xlu0 %617
        %619 = vset.pattern.permute.xlu0 0
        %620 = vperm.xlu0 %619, %v613
        %v621 = vpop.permute.xlu0 %620
        %vm622 = vcmp.eq.s32.totalorder %v585, %v618
        %vm623 = vcmp.eq.s32.totalorder %v585, %v621
        %v624 = vsel %vm622, 1, 0
        %v625 = vsel %vm623, 1, 0
        %v626 = vcvt.s32.f32 %v624
        %v627 = vcvt.s32.f32 %v625
        %v628 = vmul.f32 %v603, %v626
        %v629 = vmul.f32 %v605, %v627
        %v630 = vmul.f32 %v609, %v614
        %v631 = vmul.f32 %v611, %v615
        %632 = vmatprep.subr.mxu0 0.0
        %633 = vmatpush1.msra.mxu0 1.0
        %634 = vmatprep.subr.mxu0 0.0
        %635 = vmatpush1.msra.mxu0 1.0
        %636 = vmatprep.subr.mxu0 0.0
        %637 = vmatpush1.msra.mxu0 1.0
        %638 = vmatprep.subr.mxu0 0.0
        %639 = vmatpush1.msra.mxu0 1.0
        %640 = vmatprep.subr.mxu0 0.0
        %641 = vmatpush1.msra.mxu0 1.0
        %642 = vmatprep.subr.mxu0 0.0
        %643 = vmatpush1.msra.mxu0 1.0
        %644 = vmatprep.subr.mxu0 0.0
        %645 = vmatpush1.msra.mxu0 1.0
        %646 = vmatprep.subr.mxu0 0.0
        %647 = vmatpush1.msra.mxu0 1.0
        %648 = vmatprep.subr.mxu0 0.0
        %649 = vmatpush1.msra.mxu0 1.0
        %650 = vmatprep.subr.mxu0 0.0
        %651 = vmatpush1.msra.mxu0 1.0
        %652 = vmatprep.subr.mxu0 0.0
        %653 = vmatpush1.msra.mxu0 1.0
        %654 = vmatprep.subr.mxu0 0.0
        %655 = vmatpush1.msra.mxu0 1.0
        %656 = vmatprep.subr.mxu0 0.0
        %657 = vmatpush1.msra.mxu0 1.0
        %658 = vmatprep.subr.mxu0 0.0
        %659 = vmatpush1.msra.mxu0 1.0
        %660 = vmatprep.subr.mxu0 0.0
        %661 = vmatpush1.msra.mxu0 1.0
        %662 = vmatprep.subr.mxu0 0.0
        %663 = vmatpush1.msra.mxu0 1.0
        %664 = vmatprep.subr.mxu0 0.0
        %665 = vmatpush1.msra.mxu0 0.0
        %666 = vmatprep.subr.mxu0 0.0
        %667 = vmatpush1.msra.mxu0 0.0
        %668 = vmatprep.subr.mxu0 0.0
        %669 = vmatpush1.msra.mxu0 0.0
        %670 = vmatprep.subr.mxu0 0.0
        %671 = vmatpush1.msra.mxu0 0.0
        %672 = vmatprep.subr.mxu0 0.0
        %673 = vmatpush1.msra.mxu0 0.0
        %674 = vmatprep.subr.mxu0 0.0
        %675 = vmatpush1.msra.mxu0 0.0
        %676 = vmatprep.subr.mxu0 0.0
        %677 = vmatpush1.msra.mxu0 0.0
        %678 = vmatprep.subr.mxu0 0.0
        %679 = vmatpush1.msra.mxu0 0.0
        %680 = vmatprep.subr.mxu0 0.0
        %681 = vmatpush1.msra.mxu0 0.0
        %682 = vmatprep.subr.mxu0 0.0
        %683 = vmatpush1.msra.mxu0 0.0
        %684 = vmatprep.subr.mxu0 0.0
        %685 = vmatpush1.msra.mxu0 0.0
        %686 = vmatprep.subr.mxu0 0.0
        %687 = vmatpush1.msra.mxu0 0.0
        %688 = vmatprep.subr.mxu0 0.0
        %689 = vmatpush1.msra.mxu0 0.0
        %690 = vmatprep.subr.mxu0 0.0
        %691 = vmatpush1.msra.mxu0 0.0
        %692 = vmatprep.subr.mxu0 0.0
        %693 = vmatpush1.msra.mxu0 0.0
        %694 = vmatprep.subr.mxu0 0.0
        %695 = vmatpush1.msra.mxu0 0.0
        %696 = vmatprep.mubr.f32.mxu0 0.0
        %697 = vmatmul.mubr.f32.gmra.mrb[0].mxu0 %v603
        %v698 = vpop.f32.mrb[0].mxu0
        %v699 = vadd.f32 0.0, %v698
        %v700 = vpop.f32.mrb[0].mxu0
        %701 = vmatprep.mubr.f32.mxu0 0.0
        %702 = vmatmul.mubr.f32.gmra.mrb[0].mxu0 %v605
        %v703 = vpop.f32.mrb[0].mxu0
        %v704 = vadd.f32 0.0, %v703
        %v705 = vpop.f32.mrb[0].mxu0
        %706 = vdwg.mxu0
        %707 = vmatprep.subr.mxu0 0.0
        %708 = vmatpush1.msra.mxu0 1.0
        %709 = vmatprep.subr.mxu0 0.0
        %710 = vmatpush1.msra.mxu0 1.0
        %711 = vmatprep.subr.mxu0 0.0
        %712 = vmatpush1.msra.mxu0 1.0
        %713 = vmatprep.subr.mxu0 0.0
        %714 = vmatpush1.msra.mxu0 1.0
        %715 = vmatprep.subr.mxu0 0.0
        %716 = vmatpush1.msra.mxu0 1.0
        %717 = vmatprep.subr.mxu0 0.0
        %718 = vmatpush1.msra.mxu0 1.0
        %719 = vmatprep.subr.mxu0 0.0
        %720 = vmatpush1.msra.mxu0 1.0
        %721 = vmatprep.subr.mxu0 0.0
        %722 = vmatpush1.msra.mxu0 1.0
        %723 = vmatprep.subr.mxu0 0.0
        %724 = vmatpush1.msra.mxu0 1.0
        %725 = vmatprep.subr.mxu0 0.0
        %726 = vmatpush1.msra.mxu0 1.0
        %727 = vmatprep.subr.mxu0 0.0
        %728 = vmatpush1.msra.mxu0 1.0
        %729 = vmatprep.subr.mxu0 0.0
        %730 = vmatpush1.msra.mxu0 1.0
        %731 = vmatprep.subr.mxu0 0.0
        %732 = vmatpush1.msra.mxu0 1.0
        %733 = vmatprep.subr.mxu0 0.0
        %734 = vmatpush1.msra.mxu0 1.0
        %735 = vmatprep.subr.mxu0 0.0
        %736 = vmatpush1.msra.mxu0 1.0
        %737 = vmatprep.subr.mxu0 0.0
        %738 = vmatpush1.msra.mxu0 1.0
        %739 = vmatprep.subr.mxu0 0.0
        %740 = vmatpush1.msra.mxu0 0.0
        %741 = vmatprep.subr.mxu0 0.0
        %742 = vmatpush1.msra.mxu0 0.0
        %743 = vmatprep.subr.mxu0 0.0
        %744 = vmatpush1.msra.mxu0 0.0
        %745 = vmatprep.subr.mxu0 0.0
        %746 = vmatpush1.msra.mxu0 0.0
        %747 = vmatprep.subr.mxu0 0.0
        %748 = vmatpush1.msra.mxu0 0.0
        %749 = vmatprep.subr.mxu0 0.0
        %750 = vmatpush1.msra.mxu0 0.0
        %751 = vmatprep.subr.mxu0 0.0
        %752 = vmatpush1.msra.mxu0 0.0
        %753 = vmatprep.subr.mxu0 0.0
        %754 = vmatpush1.msra.mxu0 0.0
        %755 = vmatprep.subr.mxu0 0.0
        %756 = vmatpush1.msra.mxu0 0.0
        %757 = vmatprep.subr.mxu0 0.0
        %758 = vmatpush1.msra.mxu0 0.0
        %759 = vmatprep.subr.mxu0 0.0
        %760 = vmatpush1.msra.mxu0 0.0
        %761 = vmatprep.subr.mxu0 0.0
        %762 = vmatpush1.msra.mxu0 0.0
        %763 = vmatprep.subr.mxu0 0.0
        %764 = vmatpush1.msra.mxu0 0.0
        %765 = vmatprep.subr.mxu0 0.0
        %766 = vmatpush1.msra.mxu0 0.0
        %767 = vmatprep.subr.mxu0 0.0
        %768 = vmatpush1.msra.mxu0 0.0
        %769 = vmatprep.subr.mxu0 0.0
        %770 = vmatpush1.msra.mxu0 0.0
        %771 = vmatprep.mubr.f32.mxu0 0.0
        %772 = vmatmul.mubr.f32.gmra.mrb[0].mxu0 %v628
        %v773 = vpop.f32.mrb[0].mxu0
        %v774 = vadd.f32 0.0, %v773
        %v775 = vpop.f32.mrb[0].mxu0
        %776 = vmatprep.mubr.f32.mxu0 0.0
        %777 = vmatmul.mubr.f32.gmra.mrb[0].mxu0 %v629
        %v778 = vpop.f32.mrb[0].mxu0
        %v779 = vadd.f32 0.0, %v778
        %v780 = vpop.f32.mrb[0].mxu0
        %781 = vdwg.mxu0
        %782 = vmatprep.subr.mxu0 0.0
        %783 = vmatpush1.msra.mxu0 1.0
        %784 = vmatprep.subr.mxu0 0.0
        %785 = vmatpush1.msra.mxu0 1.0
        %786 = vmatprep.subr.mxu0 0.0
        %787 = vmatpush1.msra.mxu0 1.0
        %788 = vmatprep.subr.mxu0 0.0
        %789 = vmatpush1.msra.mxu0 1.0
        %790 = vmatprep.subr.mxu0 0.0
        %791 = vmatpush1.msra.mxu0 1.0
        %792 = vmatprep.subr.mxu0 0.0
        %793 = vmatpush1.msra.mxu0 1.0
        %794 = vmatprep.subr.mxu0 0.0
        %795 = vmatpush1.msra.mxu0 1.0
        %796 = vmatprep.subr.mxu0 0.0
        %797 = vmatpush1.msra.mxu0 1.0
        %798 = vmatprep.subr.mxu0 0.0
        %799 = vmatpush1.msra.mxu0 1.0
        %800 = vmatprep.subr.mxu0 0.0
        %801 = vmatpush1.msra.mxu0 1.0
        %802 = vmatprep.subr.mxu0 0.0
        %803 = vmatpush1.msra.mxu0 1.0
        %804 = vmatprep.subr.mxu0 0.0
        %805 = vmatpush1.msra.mxu0 1.0
        %806 = vmatprep.subr.mxu0 0.0
        %807 = vmatpush1.msra.mxu0 1.0
        %808 = vmatprep.subr.mxu0 0.0
        %809 = vmatpush1.msra.mxu0 1.0
        %810 = vmatprep.subr.mxu0 0.0
        %811 = vmatpush1.msra.mxu0 1.0
        %812 = vmatprep.subr.mxu0 0.0
        %813 = vmatpush1.msra.mxu0 1.0
        %814 = vmatprep.subr.mxu0 0.0
        %815 = vmatpush1.msra.mxu0 0.0
        %816 = vmatprep.subr.mxu0 0.0
        %817 = vmatpush1.msra.mxu0 0.0
        %818 = vmatprep.subr.mxu0 0.0
        %819 = vmatpush1.msra.mxu0 0.0
        %820 = vmatprep.subr.mxu0 0.0
        %821 = vmatpush1.msra.mxu0 0.0
        %822 = vmatprep.subr.mxu0 0.0
        %823 = vmatpush1.msra.mxu0 0.0
        %824 = vmatprep.subr.mxu0 0.0
        %825 = vmatpush1.msra.mxu0 0.0
        %826 = vmatprep.subr.mxu0 0.0
        %827 = vmatpush1.msra.mxu0 0.0
        %828 = vmatprep.subr.mxu0 0.0
        %829 = vmatpush1.msra.mxu0 0.0
        %830 = vmatprep.subr.mxu0 0.0
        %831 = vmatpush1.msra.mxu0 0.0
        %832 = vmatprep.subr.mxu0 0.0
        %833 = vmatpush1.msra.mxu0 0.0
        %834 = vmatprep.subr.mxu0 0.0
        %835 = vmatpush1.msra.mxu0 0.0
        %836 = vmatprep.subr.mxu0 0.0
        %837 = vmatpush1.msra.mxu0 0.0
        %838 = vmatprep.subr.mxu0 0.0
        %839 = vmatpush1.msra.mxu0 0.0
        %840 = vmatprep.subr.mxu0 0.0
        %841 = vmatpush1.msra.mxu0 0.0
        %842 = vmatprep.subr.mxu0 0.0
        %843 = vmatpush1.msra.mxu0 0.0
        %844 = vmatprep.subr.mxu0 0.0
        %845 = vmatpush1.msra.mxu0 0.0
        %846 = vmatprep.mubr.f32.mxu0 0.0
        %847 = vmatmul.mubr.f32.gmra.mrb[0].mxu0 %v609
        %v848 = vpop.f32.mrb[0].mxu0
        %v849 = vadd.f32 0.0, %v848
        %v850 = vpop.f32.mrb[0].mxu0
        %851 = vmatprep.mubr.f32.mxu0 0.0
        %852 = vmatmul.mubr.f32.gmra.mrb[0].mxu0 %v611
        %v853 = vpop.f32.mrb[0].mxu0
        %v854 = vadd.f32 0.0, %v853
        %v855 = vpop.f32.mrb[0].mxu0
        %856 = vdwg.mxu0
        %857 = vmatprep.subr.mxu0 0.0
        %858 = vmatpush1.msra.mxu0 1.0
        %859 = vmatprep.subr.mxu0 0.0
        %860 = vmatpush1.msra.mxu0 1.0
        %861 = vmatprep.subr.mxu0 0.0
        %862 = vmatpush1.msra.mxu0 1.0
        %863 = vmatprep.subr.mxu0 0.0
        %864 = vmatpush1.msra.mxu0 1.0
        %865 = vmatprep.subr.mxu0 0.0
        %866 = vmatpush1.msra.mxu0 1.0
        %867 = vmatprep.subr.mxu0 0.0
        %868 = vmatpush1.msra.mxu0 1.0
        %869 = vmatprep.subr.mxu0 0.0
        %870 = vmatpush1.msra.mxu0 1.0
        %871 = vmatprep.subr.mxu0 0.0
        %872 = vmatpush1.msra.mxu0 1.0
        %873 = vmatprep.subr.mxu0 0.0
        %874 = vmatpush1.msra.mxu0 1.0
        %875 = vmatprep.subr.mxu0 0.0
        %876 = vmatpush1.msra.mxu0 1.0
        %877 = vmatprep.subr.mxu0 0.0
        %878 = vmatpush1.msra.mxu0 1.0
        %879 = vmatprep.subr.mxu0 0.0
        %880 = vmatpush1.msra.mxu0 1.0
        %881 = vmatprep.subr.mxu0 0.0
        %882 = vmatpush1.msra.mxu0 1.0
        %883 = vmatprep.subr.mxu0 0.0
        %884 = vmatpush1.msra.mxu0 1.0
        %885 = vmatprep.subr.mxu0 0.0
        %886 = vmatpush1.msra.mxu0 1.0
        %887 = vmatprep.subr.mxu0 0.0
        %888 = vmatpush1.msra.mxu0 1.0
        %889 = vmatprep.subr.mxu0 0.0
        %890 = vmatpush1.msra.mxu0 0.0
        %891 = vmatprep.subr.mxu0 0.0
        %892 = vmatpush1.msra.mxu0 0.0
        %893 = vmatprep.subr.mxu0 0.0
        %894 = vmatpush1.msra.mxu0 0.0
        %895 = vmatprep.subr.mxu0 0.0
        %896 = vmatpush1.msra.mxu0 0.0
        %897 = vmatprep.subr.mxu0 0.0
        %898 = vmatpush1.msra.mxu0 0.0
        %899 = vmatprep.subr.mxu0 0.0
        %900 = vmatpush1.msra.mxu0 0.0
        %901 = vmatprep.subr.mxu0 0.0
        %902 = vmatpush1.msra.mxu0 0.0
        %903 = vmatprep.subr.mxu0 0.0
        %904 = vmatpush1.msra.mxu0 0.0
        %905 = vmatprep.subr.mxu0 0.0
        %906 = vmatpush1.msra.mxu0 0.0
        %907 = vmatprep.subr.mxu0 0.0
        %908 = vmatpush1.msra.mxu0 0.0
        %909 = vmatprep.subr.mxu0 0.0
        %910 = vmatpush1.msra.mxu0 0.0
        %911 = vmatprep.subr.mxu0 0.0
        %912 = vmatpush1.msra.mxu0 0.0
        %913 = vmatprep.subr.mxu0 0.0
        %914 = vmatpush1.msra.mxu0 0.0
        %915 = vmatprep.subr.mxu0 0.0
        %916 = vmatpush1.msra.mxu0 0.0
        %917 = vmatprep.subr.mxu0 0.0
        %918 = vmatpush1.msra.mxu0 0.0
        %919 = vmatprep.subr.mxu0 0.0
        %920 = vmatpush1.msra.mxu0 0.0
        %921 = vmatprep.mubr.f32.mxu0 0.0
        %922 = vmatmul.mubr.f32.gmra.mrb[0].mxu0 %v630
        %v923 = vpop.f32.mrb[0].mxu0
        %v924 = vadd.f32 0.0, %v923
        %v925 = vpop.f32.mrb[0].mxu0
        %926 = vmatprep.mubr.f32.mxu0 0.0
        %927 = vmatmul.mubr.f32.gmra.mrb[0].mxu0 %v631
        %v928 = vpop.f32.mrb[0].mxu0
        %v929 = vadd.f32 0.0, %v928
        %v930 = vpop.f32.mrb[0].mxu0
        %931 = vdwg.mxu0
        %932 = vmatprep.subr.mxu0 0.0
        %933 = vmatpush1.msra.mxu0 1.0
        %934 = vmatprep.subr.mxu0 0.0
        %935 = vmatpush1.msra.mxu0 1.0
        %936 = vmatprep.subr.mxu0 0.0
        %937 = vmatpush1.msra.mxu0 1.0
        %938 = vmatprep.subr.mxu0 0.0
        %939 = vmatpush1.msra.mxu0 1.0
        %940 = vmatprep.subr.mxu0 0.0
        %941 = vmatpush1.msra.mxu0 1.0
        %942 = vmatprep.subr.mxu0 0.0
        %943 = vmatpush1.msra.mxu0 1.0
        %944 = vmatprep.subr.mxu0 0.0
        %945 = vmatpush1.msra.mxu0 1.0
        %946 = vmatprep.subr.mxu0 0.0
        %947 = vmatpush1.msra.mxu0 1.0
        %948 = vmatprep.subr.mxu0 0.0
        %949 = vmatpush1.msra.mxu0 1.0
        %950 = vmatprep.subr.mxu0 0.0
        %951 = vmatpush1.msra.mxu0 1.0
        %952 = vmatprep.subr.mxu0 0.0
        %953 = vmatpush1.msra.mxu0 1.0
        %954 = vmatprep.subr.mxu0 0.0
        %955 = vmatpush1.msra.mxu0 1.0
        %956 = vmatprep.subr.mxu0 0.0
        %957 = vmatpush1.msra.mxu0 1.0
        %958 = vmatprep.subr.mxu0 0.0
        %959 = vmatpush1.msra.mxu0 1.0
        %960 = vmatprep.subr.mxu0 0.0
        %961 = vmatpush1.msra.mxu0 1.0
        %962 = vmatprep.subr.mxu0 0.0
        %963 = vmatpush1.msra.mxu0 1.0
        %964 = vmatprep.subr.mxu0 0.0
        %965 = vmatpush1.msra.mxu0 0.0
        %966 = vmatprep.subr.mxu0 0.0
        %967 = vmatpush1.msra.mxu0 0.0
        %968 = vmatprep.subr.mxu0 0.0
        %969 = vmatpush1.msra.mxu0 0.0
        %970 = vmatprep.subr.mxu0 0.0
        %971 = vmatpush1.msra.mxu0 0.0
        %972 = vmatprep.subr.mxu0 0.0
        %973 = vmatpush1.msra.mxu0 0.0
        %974 = vmatprep.subr.mxu0 0.0
        %975 = vmatpush1.msra.mxu0 0.0
        %976 = vmatprep.subr.mxu0 0.0
        %977 = vmatpush1.msra.mxu0 0.0
        %978 = vmatprep.subr.mxu0 0.0
        %979 = vmatpush1.msra.mxu0 0.0
        %980 = vmatprep.subr.mxu0 0.0
        %981 = vmatpush1.msra.mxu0 0.0
        %982 = vmatprep.subr.mxu0 0.0
        %983 = vmatpush1.msra.mxu0 0.0
        %984 = vmatprep.subr.mxu0 0.0
        %985 = vmatpush1.msra.mxu0 0.0
        %986 = vmatprep.subr.mxu0 0.0
        %987 = vmatpush1.msra.mxu0 0.0
        %988 = vmatprep.subr.mxu0 0.0
        %989 = vmatpush1.msra.mxu0 0.0
        %990 = vmatprep.subr.mxu0 0.0
        %991 = vmatpush1.msra.mxu0 0.0
        %992 = vmatprep.subr.mxu0 0.0
        %993 = vmatpush1.msra.mxu0 0.0
        %994 = vmatprep.subr.mxu0 0.0
        %995 = vmatpush1.msra.mxu0 0.0
        %996 = vmatprep.mubr.f32.mxu0 0.0
        %997 = vmatmul.mubr.f32.gmra.mrb[0].mxu0 %v614
        %v998 = vpop.f32.mrb[0].mxu0
        %v999 = vadd.f32 0.0, %v998
        %v1000 = vpop.f32.mrb[0].mxu0
        %1001 = vmatprep.mubr.f32.mxu0 0.0
        %1002 = vmatmul.mubr.f32.gmra.mrb[0].mxu0 %v615
        %v1003 = vpop.f32.mrb[0].mxu0
        %v1004 = vadd.f32 0.0, %v1003
        %v1005 = vpop.f32.mrb[0].mxu0
        %1006 = vdwg.mxu0
        %v1007 = vlaneseq
        %v1008 = vshrl.u32 %v1007, 7
        %v1009 = vadd.s32 %v1008, 8
        %v1010 = vadd.s32 %v1008, 16
        %v1011 = vadd.s32 %v1008, 24
        %v1012 = vadd.s32 %v1008, 32
        %v1013 = vadd.s32 %v1008, 40
        %v1014 = vadd.s32 %v1008, 48
        %v1015 = vadd.s32 %v1008, 56
        %v1016 = vadd.s32 %v1008, 64
        %v1017 = vadd.s32 %v1008, 72
        %v1018 = vadd.s32 %v1008, 80
        %v1019 = vadd.s32 %v1008, 88
        %v1020 = vadd.s32 %v1008, 96
        %v1021 = vadd.s32 %v1008, 104
        %v1022 = vadd.s32 %v1008, 112
        %v1023 = vadd.s32 %v1008, 120
        %vm1024 = vcmp.eq.s32.totalorder %v1008, 48
        %vm1025 = vcmp.eq.s32.totalorder %v1009, 48
        %vm1026 = vcmp.eq.s32.totalorder %v1010, 48
        %vm1027 = vcmp.eq.s32.totalorder %v1011, 48
        %vm1028 = vcmp.eq.s32.totalorder %v1012, 48
        %vm1029 = vcmp.eq.s32.totalorder %v1013, 48
        %vm1030 = vcmp.eq.s32.totalorder %v1014, 48
        %vm1031 = vcmp.eq.s32.totalorder %v1015, 48
        %vm1032 = vcmp.eq.s32.totalorder %v1016, 48
        %vm1033 = vcmp.eq.s32.totalorder %v1017, 48
        %vm1034 = vcmp.eq.s32.totalorder %v1018, 48
        %vm1035 = vcmp.eq.s32.totalorder %v1019, 48
        %vm1036 = vcmp.eq.s32.totalorder %v1020, 48
        %vm1037 = vcmp.eq.s32.totalorder %v1021, 48
        %vm1038 = vcmp.eq.s32.totalorder %v1022, 48
        %vm1039 = vcmp.eq.s32.totalorder %v1023, 48
        %v1040 = vsel %vm1024, 1, 0
        %v1041 = vsel %vm1025, 1, 0
        %v1042 = vsel %vm1026, 1, 0
        %v1043 = vsel %vm1027, 1, 0
        %v1044 = vsel %vm1028, 1, 0
        %v1045 = vsel %vm1029, 1, 0
        %v1046 = vsel %vm1030, 1, 0
        %v1047 = vsel %vm1031, 1, 0
        %v1048 = vsel %vm1032, 1, 0
        %v1049 = vsel %vm1033, 1, 0
        %v1050 = vsel %vm1034, 1, 0
        %v1051 = vsel %vm1035, 1, 0
        %v1052 = vsel %vm1036, 1, 0
        %v1053 = vsel %vm1037, 1, 0
        %v1054 = vsel %vm1038, 1, 0
        %v1055 = vsel %vm1039, 1, 0
        %v1056 = vcvt.s32.f32 %v1040
        %v1057 = vcvt.s32.f32 %v1041
        %v1058 = vcvt.s32.f32 %v1042
        %v1059 = vcvt.s32.f32 %v1043
        %v1060 = vcvt.s32.f32 %v1044
        %v1061 = vcvt.s32.f32 %v1045
        %v1062 = vcvt.s32.f32 %v1046
        %v1063 = vcvt.s32.f32 %v1047
        %v1064 = vcvt.s32.f32 %v1048
        %v1065 = vcvt.s32.f32 %v1049
        %v1066 = vcvt.s32.f32 %v1050
        %v1067 = vcvt.s32.f32 %v1051
        %v1068 = vcvt.s32.f32 %v1052
        %v1069 = vcvt.s32.f32 %v1053
        %v1070 = vcvt.s32.f32 %v1054
        %v1071 = vcvt.s32.f32 %v1055
        %vm1072 = vcmp.eq.s32.totalorder %v1008, 49
        %vm1073 = vcmp.eq.s32.totalorder %v1009, 49
        %vm1074 = vcmp.eq.s32.totalorder %v1010, 49
        %vm1075 = vcmp.eq.s32.totalorder %v1011, 49
        %vm1076 = vcmp.eq.s32.totalorder %v1012, 49
        %vm1077 = vcmp.eq.s32.totalorder %v1013, 49
        %vm1078 = vcmp.eq.s32.totalorder %v1014, 49
        %vm1079 = vcmp.eq.s32.totalorder %v1015, 49
        %vm1080 = vcmp.eq.s32.totalorder %v1016, 49
        %vm1081 = vcmp.eq.s32.totalorder %v1017, 49
        %vm1082 = vcmp.eq.s32.totalorder %v1018, 49
        %vm1083 = vcmp.eq.s32.totalorder %v1019, 49
        %vm1084 = vcmp.eq.s32.totalorder %v1020, 49
        %vm1085 = vcmp.eq.s32.totalorder %v1021, 49
        %vm1086 = vcmp.eq.s32.totalorder %v1022, 49
        %vm1087 = vcmp.eq.s32.totalorder %v1023, 49
        %v1088 = vsel %vm1072, 1, 0
        %v1089 = vsel %vm1073, 1, 0
        %v1090 = vsel %vm1074, 1, 0
        %v1091 = vsel %vm1075, 1, 0
        %v1092 = vsel %vm1076, 1, 0
        %v1093 = vsel %vm1077, 1, 0
        %v1094 = vsel %vm1078, 1, 0
        %v1095 = vsel %vm1079, 1, 0
        %v1096 = vsel %vm1080, 1, 0
        %v1097 = vsel %vm1081, 1, 0
        %v1098 = vsel %vm1082, 1, 0
        %v1099 = vsel %vm1083, 1, 0
        %v1100 = vsel %vm1084, 1, 0
        %v1101 = vsel %vm1085, 1, 0
        %v1102 = vsel %vm1086, 1, 0
        %v1103 = vsel %vm1087, 1, 0
        %v1104 = vcvt.s32.f32 %v1088
        %v1105 = vcvt.s32.f32 %v1089
        %v1106 = vcvt.s32.f32 %v1090
        %v1107 = vcvt.s32.f32 %v1091
        %v1108 = vcvt.s32.f32 %v1092
        %v1109 = vcvt.s32.f32 %v1093
        %v1110 = vcvt.s32.f32 %v1094
        %v1111 = vcvt.s32.f32 %v1095
        %v1112 = vcvt.s32.f32 %v1096
        %v1113 = vcvt.s32.f32 %v1097
        %v1114 = vcvt.s32.f32 %v1098
        %v1115 = vcvt.s32.f32 %v1099
        %v1116 = vcvt.s32.f32 %v1100
        %v1117 = vcvt.s32.f32 %v1101
        %v1118 = vcvt.s32.f32 %v1102
        %v1119 = vcvt.s32.f32 %v1103
        %v1120 = vsub.f32 %v1056, %v1104
        %v1121 = vsub.f32 %v1057, %v1105
        %v1122 = vsub.f32 %v1058, %v1106
        %v1123 = vsub.f32 %v1059, %v1107
        %v1124 = vsub.f32 %v1060, %v1108
        %v1125 = vsub.f32 %v1061, %v1109
        %v1126 = vsub.f32 %v1062, %v1110
        %v1127 = vsub.f32 %v1063, %v1111
        %v1128 = vsub.f32 %v1064, %v1112
        %v1129 = vsub.f32 %v1065, %v1113
        %v1130 = vsub.f32 %v1066, %v1114
        %v1131 = vsub.f32 %v1067, %v1115
        %v1132 = vsub.f32 %v1068, %v1116
        %v1133 = vsub.f32 %v1069, %v1117
        %v1134 = vsub.f32 %v1070, %v1118
        %v1135 = vsub.f32 %v1071, %v1119
        %v1136 = vld [vmem:[#allocation2] sm:$0x1]
        %v1138 = vlaneseq
        %v1139 = vshrl.u32 %v1138, 7
        %v1140 = vsub.s32 0, %v1139
        %v1141 = vrot.slane %v1136, %v1140
        %1142 = vset.pattern.permute.xlu0 0
        %1143 = vperm.xlu0 %1142, %v1141
        %v1144 = vpop.permute.xlu0 %1143
        %1146 = vmatprep.subr.mxu0 0.0
        %1147 = vmatpush1.msra.mxu0 %v1120
        %1148 = vmatprep.subr.mxu0 0.0
        %1149 = vmatpush1.msra.mxu0 %v1121
        %1150 = vmatprep.subr.mxu0 0.0
        %1151 = vmatpush1.msra.mxu0 %v1122
        %1152 = vmatprep.subr.mxu0 0.0
        %1153 = vmatpush1.msra.mxu0 %v1123
        %1154 = vmatprep.subr.mxu0 0.0
        %1155 = vmatpush1.msra.mxu0 %v1124
        %1156 = vmatprep.subr.mxu0 0.0
        %1157 = vmatpush1.msra.mxu0 %v1125
        %1158 = vmatprep.subr.mxu0 0.0
        %1159 = vmatpush1.msra.mxu0 %v1126
        %1160 = vmatprep.subr.mxu0 0.0
        %1161 = vmatpush1.msra.mxu0 %v1127
        %1162 = vmatprep.subr.mxu0 0.0
        %1163 = vmatpush1.msra.mxu0 %v1128
        %1164 = vmatprep.subr.mxu0 0.0
        %1165 = vmatpush1.msra.mxu0 %v1129
        %1166 = vmatprep.subr.mxu0 0.0
        %1167 = vmatpush1.msra.mxu0 %v1130
        %1168 = vmatprep.subr.mxu0 0.0
        %1169 = vmatpush1.msra.mxu0 %v1131
        %1170 = vmatprep.subr.mxu0 0.0
        %1171 = vmatpush1.msra.mxu0 %v1132
        %1172 = vmatprep.subr.mxu0 0.0
        %1173 = vmatpush1.msra.mxu0 %v1133
        %1174 = vmatprep.subr.mxu0 0.0
        %1175 = vmatpush1.msra.mxu0 %v1134
        %1176 = vmatprep.subr.mxu0 0.0
        %1177 = vmatpush1.msra.mxu0 %v1135
        %1178 = vmatprep.subr.mxu0 0.0
        %1179 = vmatpush1.msra.mxu0 0.0
        %1180 = vmatprep.subr.mxu0 0.0
        %1181 = vmatpush1.msra.mxu0 0.0
        %1182 = vmatprep.subr.mxu0 0.0
        %1183 = vmatpush1.msra.mxu0 0.0
        %1184 = vmatprep.subr.mxu0 0.0
        %1185 = vmatpush1.msra.mxu0 0.0
        %1186 = vmatprep.subr.mxu0 0.0
        %1187 = vmatpush1.msra.mxu0 0.0
        %1188 = vmatprep.subr.mxu0 0.0
        %1189 = vmatpush1.msra.mxu0 0.0
        %1190 = vmatprep.subr.mxu0 0.0
        %1191 = vmatpush1.msra.mxu0 0.0
        %1192 = vmatprep.subr.mxu0 0.0
        %1193 = vmatpush1.msra.mxu0 0.0
        %1194 = vmatprep.subr.mxu0 0.0
        %1195 = vmatpush1.msra.mxu0 0.0
        %1196 = vmatprep.subr.mxu0 0.0
        %1197 = vmatpush1.msra.mxu0 0.0
        %1198 = vmatprep.subr.mxu0 0.0
        %1199 = vmatpush1.msra.mxu0 0.0
        %1200 = vmatprep.subr.mxu0 0.0
        %1201 = vmatpush1.msra.mxu0 0.0
        %1202 = vmatprep.subr.mxu0 0.0
        %1203 = vmatpush1.msra.mxu0 0.0
        %1204 = vmatprep.subr.mxu0 0.0
        %1205 = vmatpush1.msra.mxu0 0.0
        %1206 = vmatprep.subr.mxu0 0.0
        %1207 = vmatpush1.msra.mxu0 0.0
        %1208 = vmatprep.subr.mxu0 0.0
        %1209 = vmatpush1.msra.mxu0 0.0
        %1210 = vmatprep.mubr.f32.mxu0 0.0
        %1211 = vmatmul.mubr.f32.gmra.mrb[0].mxu0 %v521
        %v1212 = vpop.f32.mrb[0].mxu0
        %v1213 = vadd.f32 %v1144, %v1212
        %v1214 = vpop.f32.mrb[0].mxu0
        %1215 = vmatprep.mubr.f32.mxu0 0.0
        %1216 = vmatmul.mubr.f32.gmra.mrb[0].mxu0 %v524
        %v1217 = vpop.f32.mrb[0].mxu0
        %v1218 = vadd.f32 %v1144, %v1217
        %v1219 = vpop.f32.mrb[0].mxu0
        %1220 = vdwg.mxu0
        %v1221 = vxor.u32 %v1213, 2147483648
        %v1222 = vxor.u32 %v1218, 2147483648
        %v1223 = vmul.f32 %v1221, 1.442695
        %v1224 = vpow.pop %v1223
        %v1225 = vmul.f32 %v1222, 1.442695
        %v1226 = vpow.pop %v1225
        %v1227 = vadd.f32 %v1224, 1.0
        %v1228 = vadd.f32 %v1226, 1.0
        %v1229 = vrcp.pop %v1227
        %v1230 = vmul.f32 1.0, %v1229
        %v1231 = vrcp.pop %v1228
        %v1232 = vmul.f32 1.0, %v1231
        %v1233 = vld [vmem:[%s446] sm:$0xff]
        %v1234 = vld [vmem:[%s446 + $0x8] sm:$0xff]
        %1236 = vset.pattern.permute.xlu0 0
        %1237 = vperm.xlu0 %1236, %v1233
        %v1238 = vpop.permute.xlu0 %1237
        %1241 = vset.pattern.permute.xlu0 0
        %1242 = vperm.xlu0 %1241, %v1234
        %v1243 = vpop.permute.xlu0 %1242
        %v1245 = vadd.f32 %v1238, %v999
        %v1246 = vadd.f32 %v1243, %v1004
        %vm1247 = vcmp.gt.f32.partialorder %v1245, 0.0
        %vm1248 = vcmp.gt.f32.partialorder %v1246, 0.0
        %v1249 = vsel %vm1247, 1, 0
        %v1250 = vsel %vm1248, 1, 0
        %v1251 = vcvt.s32.f32 %v1249
        %v1252 = vcvt.s32.f32 %v1250
        %v1253 = vmul.f32 %v1230, %v1238
        %v1254 = vmul.f32 %v1232, %v1243
        %v1255 = vmul.f32 %v1253, %v774
        %v1256 = vmul.f32 %v1254, %v779
        %v1257 = vrcp.pop %v699
        %v1258 = vmul.f32 %v1255, %v1257
        %v1259 = vrcp.pop %v704
        %v1260 = vmul.f32 %v1256, %v1259
        %v1261 = vsub.f32 1.0, %v1230
        %v1262 = vsub.f32 1.0, %v1232
        %v1263 = vmul.f32 %v1261, %v924
        %v1264 = vmul.f32 %v1262, %v929
        %v1265 = vrcp.pop %v849
        %v1266 = vmul.f32 %v1263, %v1265
        %v1267 = vrcp.pop %v854
        %v1268 = vmul.f32 %v1264, %v1267
        %v1269 = vadd.f32 %v1258, %v1266
        %v1270 = vadd.f32 %v1260, %v1268
        %v1271 = vsub.f32 1.0, %v1251
        %v1272 = vsub.f32 1.0, %v1252
        %v1273 = vmul.f32 %v1271, 1e-07
        %v1274 = vmul.f32 %v1272, 1e-07
        %v1275 = vadd.f32 %v1269, %v1273
        %v1276 = vadd.f32 %v1270, %v1274
        %v1277 = vlog2.pop %v1275
        %v1278 = vmul.f32 %v1277, 0.6931472
        %v1279 = vlog2.pop %v1276
        %v1280 = vmul.f32 %v1279, 0.6931472
        %v1281 = vmul.f32 %v1278, %v1251
        %v1282 = vmul.f32 %v1280, %v1252
        %v1283 = vadd.f32 %v1281, %v1282
        %v1284 = vrot.slane %v1283, 4
        %v1285 = vadd.f32 %v1283, %v1284
        %v1286 = vrot.slane %v1285, 2
        %v1287 = vadd.f32 %v1285, %v1286
        %v1288 = vrot.slane %v1287, 1
        %v1289 = vadd.f32 %v1287, %v1288
        %p1290 = scmp.eq.s32.totalorder %s32, 0
        // Predicated region
        $region57: #{tpu_custom_call.1} parent=47 // pred_check
          %p1291 = pneg %p1290
        $region58: #{tpu_custom_call.1} parent=47 // pred_check_branch
          %1293 = sbr.rel (%p1291) target = $region60
        $region59: #{tpu_custom_call.1} parent=47 // pred_region
          %1294 = vst [vmem:[%s421] sm:$0x1] 0.0
        $region60: #{tpu_custom_call.1} parent=47 // pred_fallthru
          _
        %v1295 = vld [vmem:[%s421] sm:$0x1]
        %v1296 = vadd.f32 %v1295, %v1289
        %1297 = vst [vmem:[%s421] sm:$0x1] %v1296
        %s1298 = sand.u32 %s227, 1
        %s1299 = scalar_lea.sflag [#allocation5], %s1298
        %s1300 = sand.u32 %s227, 1
        %s1301 = scalar_lea.vmem [#allocation8], %s1300
        // Predicated region
        $region61: #{tpu_custom_call.1} parent=47 // pred_check
          %p1302 = pneg %p237
        $region62: #{tpu_custom_call.1} parent=47 // pred_check_branch
          %1304 = sbr.rel (%p1302) target = $region64
        $region63: #{tpu_custom_call.1} parent=47 // pred_region
          %s1306 = ssub.s32 16, 16
          %1307 = vsyncadd %s1299, %s1306
          %s1308 = smul.addr %s31, 16
          %s1309 = scalar_lea.hbm %s7, %s1308
          %s1311 = sshll.u32 %s1301, 4
          %s1312 = int_to_ptr.vmem [resolvable:$true] %s1311
          %1314 = dma.vmem_to_hbm [thread:$0]  %s1312, 16, %s1309, %s1299
        $region64: #{tpu_custom_call.1} parent=47 // pred_fallthru
          _
      $region48: #{tpu_custom_call.1} parent=5 // pred_fallthru
        _
      %p1315 = scmp.le.s32.totalorder 2, %s22
      // Predicated region
      $region65: #{tpu_custom_call.1} parent=5 // pred_check
        %p1316 = pneg %p1315
      $region66: #{tpu_custom_call.1} parent=5 // pred_check_branch
        %1318 = sbr.rel (%p1316) target = $region68
      $region67: #{tpu_custom_call.1} parent=5 // pred_region
        %s1319 = ssub.s32 %s22, 2
        // Predicated region
        $region69: #{tpu_custom_call.1} parent=67 // pred_check
          %p1320 = pneg %p243
        $region70: #{tpu_custom_call.1} parent=67 // pred_check_branch
          %1322 = sbr.rel (%p1320) target = $region72
        $region71: #{tpu_custom_call.1} parent=67 // pred_region
          %s1323 = sand.u32 %s228, 1
          %s1324 = scalar_lea.sflag [#allocation5], %s1323
          %s1325 = sand.u32 %s228, 1
          %s1326 = scalar_lea.vmem [#allocation8], %s1325
          %1327 = dma.done %s1324, 16
        $region72: #{tpu_custom_call.1} parent=67 // pred_fallthru
          _
      $region68: #{tpu_custom_call.1} parent=5 // pred_fallthru
        _
    $region6: #{tpu_custom_call.1} parent=1 // loop_footer
      %s26 = sadd.s32 1, %s22
    $region7: #{tpu_custom_call.1} parent=1 // loop_footer_branch
      %21 = sbr.rel target = $region3
    $region8: #{tpu_custom_call.1} parent=1 // loop_exit
      _
    %1328 = vsyncpa [#allocation4], 1
    %s1329 = scalar_lea.sflag [#allocation4], 1
    %1330 = vsyncpa %s1329, 1
    %1331 = vsyncpa [#allocation7], 1
    %1332 = vsyncpa [#allocation5], 1
    %s1333 = scalar_lea.sflag [#allocation5], 1
    %1334 = vsyncpa %s1333, 1

</llo_original>
